<compile_context>
chip_gen: v5e
topology: v5e:2x2
jax: 0.10.0
libtpu: 0.0.40
codegen_flags: <defaults>
</compile_context>

<pallas_src>
import functools

import jax
import jax.numpy as jnp
from jax.experimental import pallas as pl
from jax.experimental.pallas import tpu as pltpu


# ----------------------------------------------------------------------------
# Fused kernel: conv1(GEMM)+bn1+relu6  ->  conv2(9 shifted slabs)+bn2+relu6
#   p1_ref:   (1, R2, K1)  conv1 im2col patches on the extended (padded) grid
#   w1_ref:   (K1, Co)     conv1 weight with bn1 scale folded in   (resident)
#   b1_ref:   (1, Co)      folded bn1 bias                          (resident)
#   mask_ref: (R2, 1)      1.0 on the interior, 0.0 on the border   (resident)
#   w2_ref:   (9, Co, Co)  conv2 per-tap weights with bn2 folded    (resident)
#   b2_ref:   (1, Co)      folded bn2 bias                          (resident)
#   o_ref:    (1, Qo, Co)  conv2 output rows (incl. 2 junk cols per image row)
#   h1p_scr:  (R2+8, Co)   VMEM scratch holding the padded intermediate
# ----------------------------------------------------------------------------
def _resblock_kernel(p1_ref, w1_ref, b1_ref, mask_ref, w2_ref, b2_ref,
                     o_ref, h1p_scr, *, Ho, Wo, Co):
    Wg = Wo + 2                     # padded width of the intermediate grid
    R2 = (Ho + 2) * Wg              # rows of the padded intermediate
    Qo = Ho * Wg                    # conv2 output rows (incl. junk columns)

    # ---- conv1 + bn1 + relu6 on the extended grid (one MXU GEMM) ----
    acc1 = jnp.dot(p1_ref[0], w1_ref[...], preferred_element_type=jnp.float32)
    act1 = jnp.clip(acc1 + b1_ref[...], 0.0, 6.0)
    # Zero the 1-pixel border: this makes the VMEM intermediate exactly the
    # zero-padded input that conv2 (padding=1) expects.
    h1p = act1 * mask_ref[...]

    h1p_scr[...] = jnp.zeros(h1p_scr.shape, h1p_scr.dtype)
    h1p_scr[0:R2, :] = h1p

    # ---- conv2 + bn2 + relu6: nine shifted contiguous row-slabs ----
    acc2 = jnp.zeros((Qo, Co), jnp.float32)
    for t in range(9):              # static 9-tap loop
        dy, dx = t // 3, t % 3
        base = dy * Wg + dx         # static row offset into the padded layout
        slab = h1p_scr[pl.ds(base, Qo), :]
        acc2 = acc2 + jnp.dot(slab, w2_ref[t],
                              preferred_element_type=jnp.float32)

    o_ref[0] = jnp.clip(acc2 + b2_ref[...], 0.0, 6.0).astype(o_ref.dtype)


# ----------------------------------------------------------------------------
# Wrapper-side patch extraction for conv1 on the EXTENDED output grid
# (grid of size (Ho+2, Wo+2); the extra border rows are masked to zero in the
#  kernel and become conv2's zero padding).
# ----------------------------------------------------------------------------
def _conv1_patches_extended(x_nhwc, *, stride=2):
    N, H, W, C = x_nhwc.shape
    Ho = (H + 2 - 3) // stride + 1
    Wo = (W + 2 - 3) // stride + 1
    Hg, Wg = Ho + 2, Wo + 2
    # conv padding (1) + one extra output position each side -> pad by 3.
    xp = jnp.pad(x_nhwc, ((0, 0), (3, 3), (3, 3), (0, 0)))
    cols = []
    for dy in range(3):
        for dx in range(3):
            cols.append(
                xp[:, dy:dy + stride * Hg:stride, dx:dx + stride * Wg:stride, :])
    patches = jnp.stack(cols, axis=3)            # (N, Hg, Wg, 9, C)
    return patches.reshape(N, Hg * Wg, 9 * C), Ho, Wo


# ----------------------------------------------------------------------------
# ResBlock forward (NCHW in / NCHW out), inference-mode BN folded into weights
# ----------------------------------------------------------------------------
def resblock_forward(x_nchw, params, *, eps=1e-5):
    N, Cin, H, W = x_nchw.shape
    Co = params["w1"].shape[0]

    x = jnp.transpose(x_nchw, (0, 2, 3, 1))      # NCHW -> NHWC

    p1, Ho, Wo = _conv1_patches_extended(x, stride=2)
    Hg, Wg = Ho + 2, Wo + 2
    R2, Qo, K1 = Hg * Wg, Ho * Wg, 9 * Cin

    # Fold inference BatchNorm into conv weights / biases.
    s1 = params["bn1_gamma"] / jnp.sqrt(params["bn1_var"] + eps)
    b1 = (params["bn1_beta"] - params["bn1_mean"] * s1).reshape(1, Co)
    w1m = jnp.transpose(params["w1"], (2, 3, 1, 0)).reshape(K1, Co) * s1[None, :]

    s2 = params["bn2_gamma"] / jnp.sqrt(params["bn2_var"] + eps)
    b2 = (params["bn2_beta"] - params["bn2_mean"] * s2).reshape(1, Co)
    w2t = jnp.transpose(params["w2"], (2, 3, 1, 0)).reshape(9, Co, Co) \
        * s2[None, None, :]

    # Interior mask for the extended conv1 grid (border rows -> 0).
    r = jnp.arange(R2)
    hp, wp = r // Wg, r % Wg
    mask = ((hp >= 1) & (hp <= Ho) & (wp >= 1) & (wp <= Wo)).astype(jnp.float32)
    mask = mask.reshape(R2, 1)

    kernel = functools.partial(_resblock_kernel, Ho=Ho, Wo=Wo, Co=Co)

    cost = pl.CostEstimate(
        flops=2 * N * (R2 * K1 * Co + 9 * Qo * Co * Co),
        transcendentals=0,
        bytes_accessed=4 * (N * R2 * K1 + K1 * Co + 9 * Co * Co
                            + 2 * Co + R2 + N * Qo * Co),
    )

    out_full = pl.pallas_call(
        kernel,
        out_shape=jax.ShapeDtypeStruct((N, Qo, Co), jnp.float32),
        grid=(N,),
        in_specs=[
            # conv1 patches: last two block dims == full array dims -> dense
            # DMA with NO K zero-padding (review item 1).
            pl.BlockSpec((1, R2, K1), lambda n: (n, 0, 0)),
            pl.BlockSpec((K1, Co), lambda n: (0, 0)),        # W1 folded, resident
            pl.BlockSpec((1, Co), lambda n: (0, 0)),         # b1, resident
            pl.BlockSpec((R2, 1), lambda n: (0, 0)),         # border mask, resident
            pl.BlockSpec((9, Co, Co), lambda n: (0, 0, 0)),  # W2 taps, resident
            pl.BlockSpec((1, Co), lambda n: (0, 0)),         # b2, resident
        ],
        # Output last dim = Co (full-dim exception): only real bytes written
        # (review item 2, option (a)).
        out_specs=pl.BlockSpec((1, Qo, Co), lambda n: (n, 0, 0)),
        scratch_shapes=[pltpu.VMEM((R2 + 8, Co), jnp.float32)],
        compiler_params=pltpu.CompilerParams(
            # Batch axis parallel -> sharded across both TensorCores on v7x.
            dimension_semantics=("parallel",),
        ),
        cost_estimate=cost,
    )(p1, w1m, b1, mask, w2t, b2)

    # Drop the 2 junk columns per image row (only wrapper copy left; it is on
    # the smallest tensor in the whole pipeline).
    out = out_full.reshape(N, Ho, Wg, Co)[:, :, :Wo, :]
    return jnp.transpose(out, (0, 3, 1, 2))      # NHWC -> NCHW


# ----------------------------------------------------------------------------
# Pure-JAX reference (eval-mode BN), for correctness check
# ----------------------------------------------------------------------------
def resblock_reference(x_nchw, params, *, eps=1e-5):
    def conv(x, w, stride):
        return jax.lax.conv_general_dilated(
            x, w, window_strides=(stride, stride), padding=((1, 1), (1, 1)),
            dimension_numbers=("NCHW", "OIHW", "NCHW"),
            precision=jax.lax.Precision.HIGHEST)

    def bn(x, g, b, m, v):
        g = g.reshape(1, -1, 1, 1); b = b.reshape(1, -1, 1, 1)
        m = m.reshape(1, -1, 1, 1); v = v.reshape(1, -1, 1, 1)
        return (x - m) / jnp.sqrt(v + eps) * g + b

    relu6 = lambda t: jnp.clip(t, 0.0, 6.0)

    x = conv(x_nchw, params["w1"], 2)
    x = relu6(bn(x, params["bn1_gamma"], params["bn1_beta"],
                 params["bn1_mean"], params["bn1_var"]))
    x = conv(x, params["w2"], 1)
    x = relu6(bn(x, params["bn2_gamma"], params["bn2_beta"],
                 params["bn2_mean"], params["bn2_var"]))
    return x


# ----------------------------------------------------------------------------
if __name__ == "__main__":
    N, Cin, Cout, H, W = 2, 4, 8, 16, 16

    key = jax.random.PRNGKey(0)
    keys = jax.random.split(key, 9)

    params = {
        "w1": 0.1 * jax.random.normal(keys[0], (Cout, Cin, 3, 3), jnp.float32),
        "w2": 0.1 * jax.random.normal(keys[1], (Cout, Cout, 3, 3), jnp.float32),
        "bn1_gamma": 1.0 + 0.1 * jax.random.normal(keys[2], (Cout,), jnp.float32),
        "bn1_beta": 0.1 * jax.random.normal(keys[3], (Cout,), jnp.float32),
        "bn1_mean": 0.05 * jax.random.normal(keys[4], (Cout,), jnp.float32),
        "bn1_var": 1.0 + 0.1 * jax.nn.softplus(
            jax.random.normal(keys[5], (Cout,), jnp.float32)),
        "bn2_gamma": 1.0 + 0.1 * jax.random.normal(keys[6], (Cout,), jnp.float32),
        "bn2_beta": 0.1 * jax.random.normal(keys[7], (Cout,), jnp.float32),
        "bn2_mean": jnp.zeros((Cout,), jnp.float32),
        "bn2_var": jnp.ones((Cout,), jnp.float32),
    }

    x = jax.random.normal(keys[8], (N, Cin, H, W), jnp.float32)

    fwd = jax.jit(resblock_forward)
    out = jax.block_until_ready(fwd(x, params))
    ref = jax.block_until_ready(jax.jit(resblock_reference)(x, params))

    assert out.shape == (N, Cout, H // 2, W // 2), out.shape
    # BN folding + MXU accumulation order differ slightly from the reference.
    max_err = float(jnp.max(jnp.abs(out - ref)))
    assert jnp.allclose(out, ref, atol=1e-3, rtol=1e-3), max_err

    print("KERNEL_OK")
</pallas_src>

<mosaic_0001>
module attributes {stable_mosaic.version = 11 : i64} {
  func.func @_resblock_kernel(%arg0: i32, %arg1: memref<1x100x36xf32, #tpu.memory_space<vmem>>, %arg2: memref<36x8xf32, #tpu.memory_space<vmem>>, %arg3: memref<1x8xf32, #tpu.memory_space<vmem>>, %arg4: memref<100x1xf32, #tpu.memory_space<vmem>>, %arg5: memref<9x8x8xf32, #tpu.memory_space<vmem>>, %arg6: memref<1x8xf32, #tpu.memory_space<vmem>>, %arg7: memref<1x80x8xf32, #tpu.memory_space<vmem>>, %arg8: memref<108x8xf32, #tpu.memory_space<vmem>>) attributes {dimension_semantics = [#tpu.dimension_semantics<parallel>], iteration_bounds = array<i64: 2>, scalar_prefetch = 0 : i64, scratch_operands = 1 : i64, tpu.core_type = #tpu.core_type<tc>, window_params = [{transform_indices = @transform_0, window_bounds = array<i64: 1, 100, 36>}, {pipeline_mode = #tpu.pipeline_mode<synchronous>, transform_indices = @transform_1, window_bounds = array<i64: 36, 8>}, {pipeline_mode = #tpu.pipeline_mode<synchronous>, transform_indices = @transform_2, window_bounds = array<i64: 1, 8>}, {pipeline_mode = #tpu.pipeline_mode<synchronous>, transform_indices = @transform_3, window_bounds = array<i64: 100, 1>}, {pipeline_mode = #tpu.pipeline_mode<synchronous>, transform_indices = @transform_4, window_bounds = array<i64: 9, 8, 8>}, {pipeline_mode = #tpu.pipeline_mode<synchronous>, transform_indices = @transform_5, window_bounds = array<i64: 1, 8>}, {transform_indices = @transform_6, window_bounds = array<i64: 1, 80, 8>}]} {
    %c0 = arith.constant 0 : index
    %c0_0 = arith.constant 0 : index
    %c0_1 = arith.constant 0 : index
    %0 = vector.load %arg1[%c0, %c0_0, %c0_1] : memref<1x100x36xf32, #tpu.memory_space<vmem>>, vector<1x100x36xf32>
    %1 = vector.shape_cast %0 : vector<1x100x36xf32> to vector<100x36xf32>
    %c0_2 = arith.constant 0 : index
    %c0_3 = arith.constant 0 : index
    %2 = vector.load %arg2[%c0_2, %c0_3] : memref<36x8xf32, #tpu.memory_space<vmem>>, vector<36x8xf32>
    %cst = arith.constant dense<0.000000e+00> : vector<100x8xf32>
    %3 = tpu.matmul %1, %2, %cst {dimension_numbers = #tpu.dot_dimension_numbers<[1], [0], [0], [1], [0, 0, 1, 1], [], []>} : vector<100x36xf32>, vector<36x8xf32>, vector<100x8xf32> -> vector<100x8xf32>
    %c0_4 = arith.constant 0 : index
    %c0_5 = arith.constant 0 : index
    %4 = vector.load %arg3[%c0_4, %c0_5] : memref<1x8xf32, #tpu.memory_space<vmem>>, vector<1x8xf32>
    %5 = vector.broadcast %4 : vector<1x8xf32> to vector<100x8xf32>
    %6 = arith.addf %3, %5 : vector<100x8xf32>
    %cst_6 = arith.constant 0.000000e+00 : f32
    %cst_7 = arith.constant 6.000000e+00 : f32
    %7 = vector.broadcast %cst_6 : f32 to vector<100x8xf32>
    %8 = arith.maximumf %7, %6 : vector<100x8xf32>
    %9 = vector.broadcast %cst_7 : f32 to vector<100x8xf32>
    %10 = arith.minimumf %9, %8 : vector<100x8xf32>
    %c0_8 = arith.constant 0 : index
    %c0_9 = arith.constant 0 : index
    %11 = vector.load %arg4[%c0_8, %c0_9] : memref<100x1xf32, #tpu.memory_space<vmem>>, vector<100x1xf32>
    %12 = vector.broadcast %11 : vector<100x1xf32> to vector<100x8xf32>
    %13 = arith.mulf %10, %12 : vector<100x8xf32>
    %cst_10 = arith.constant 0.000000e+00 : f32
    %14 = vector.broadcast %cst_10 : f32 to vector<108x8xf32>
    %c0_11 = arith.constant 0 : index
    %c0_12 = arith.constant 0 : index
    %15 = vector.load %arg8[%c0_11, %c0_12] : memref<108x8xf32, #tpu.memory_space<vmem>>, vector<108x8xf32>
    tpu.vector_store %arg8[%c0_11, %c0_12], %14 {strides = array<i32>} : memref<108x8xf32, #tpu.memory_space<vmem>>, vector<108x8xf32>,
    %c0_13 = arith.constant 0 : index
    %c0_14 = arith.constant 0 : index
    %16 = vector.load %arg8[%c0_13, %c0_14] : memref<108x8xf32, #tpu.memory_space<vmem>>, vector<100x8xf32>
    tpu.vector_store %arg8[%c0_13, %c0_14], %13 {strides = array<i32>} : memref<108x8xf32, #tpu.memory_space<vmem>>, vector<100x8xf32>,
    %cst_15 = arith.constant 0.000000e+00 : f32
    %17 = vector.broadcast %cst_15 : f32 to vector<80x8xf32>
    %c0_16 = arith.constant 0 : index
    %c0_17 = arith.constant 0 : index
    %18 = vector.load %arg8[%c0_16, %c0_17] : memref<108x8xf32, #tpu.memory_space<vmem>>, vector<80x8xf32>
    %c0_18 = arith.constant 0 : index
    %c0_19 = arith.constant 0 : index
    %c0_20 = arith.constant 0 : index
    %19 = vector.load %arg5[%c0_18, %c0_19, %c0_20] : memref<9x8x8xf32, #tpu.memory_space<vmem>>, vector<1x8x8xf32>
    %20 = vector.shape_cast %19 : vector<1x8x8xf32> to vector<8x8xf32>
    %cst_21 = arith.constant dense<0.000000e+00> : vector<80x8xf32>
    %21 = tpu.matmul %18, %20, %cst_21 {dimension_numbers = #tpu.dot_dimension_numbers<[1], [0], [0], [1], [0, 0, 1, 1], [], []>} : vector<80x8xf32>, vector<8x8xf32>, vector<80x8xf32> -> vector<80x8xf32>
    %22 = arith.addf %17, %21 : vector<80x8xf32>
    %c1 = arith.constant 1 : index
    %c0_22 = arith.constant 0 : index
    %23 = vector.load %arg8[%c1, %c0_22] : memref<108x8xf32, #tpu.memory_space<vmem>>, vector<80x8xf32>
    %c1_23 = arith.constant 1 : index
    %c0_24 = arith.constant 0 : index
    %c0_25 = arith.constant 0 : index
    %24 = vector.load %arg5[%c1_23, %c0_24, %c0_25] : memref<9x8x8xf32, #tpu.memory_space<vmem>>, vector<1x8x8xf32>
    %25 = vector.shape_cast %24 : vector<1x8x8xf32> to vector<8x8xf32>
    %cst_26 = arith.constant dense<0.000000e+00> : vector<80x8xf32>
    %26 = tpu.matmul %23, %25, %cst_26 {dimension_numbers = #tpu.dot_dimension_numbers<[1], [0], [0], [1], [0, 0, 1, 1], [], []>} : vector<80x8xf32>, vector<8x8xf32>, vector<80x8xf32> -> vector<80x8xf32>
    %27 = arith.addf %22, %26 : vector<80x8xf32>
    %c2 = arith.constant 2 : index
    %c0_27 = arith.constant 0 : index
    %28 = vector.load %arg8[%c2, %c0_27] : memref<108x8xf32, #tpu.memory_space<vmem>>, vector<80x8xf32>
    %c2_28 = arith.constant 2 : index
    %c0_29 = arith.constant 0 : index
    %c0_30 = arith.constant 0 : index
    %29 = vector.load %arg5[%c2_28, %c0_29, %c0_30] : memref<9x8x8xf32, #tpu.memory_space<vmem>>, vector<1x8x8xf32>
    %30 = vector.shape_cast %29 : vector<1x8x8xf32> to vector<8x8xf32>
    %cst_31 = arith.constant dense<0.000000e+00> : vector<80x8xf32>
    %31 = tpu.matmul %28, %30, %cst_31 {dimension_numbers = #tpu.dot_dimension_numbers<[1], [0], [0], [1], [0, 0, 1, 1], [], []>} : vector<80x8xf32>, vector<8x8xf32>, vector<80x8xf32> -> vector<80x8xf32>
    %32 = arith.addf %27, %31 : vector<80x8xf32>
    %c10 = arith.constant 10 : index
    %c0_32 = arith.constant 0 : index
    %33 = vector.load %arg8[%c10, %c0_32] : memref<108x8xf32, #tpu.memory_space<vmem>>, vector<80x8xf32>
    %c3 = arith.constant 3 : index
    %c0_33 = arith.constant 0 : index
    %c0_34 = arith.constant 0 : index
    %34 = vector.load %arg5[%c3, %c0_33, %c0_34] : memref<9x8x8xf32, #tpu.memory_space<vmem>>, vector<1x8x8xf32>
    %35 = vector.shape_cast %34 : vector<1x8x8xf32> to vector<8x8xf32>
    %cst_35 = arith.constant dense<0.000000e+00> : vector<80x8xf32>
    %36 = tpu.matmul %33, %35, %cst_35 {dimension_numbers = #tpu.dot_dimension_numbers<[1], [0], [0], [1], [0, 0, 1, 1], [], []>} : vector<80x8xf32>, vector<8x8xf32>, vector<80x8xf32> -> vector<80x8xf32>
    %37 = arith.addf %32, %36 : vector<80x8xf32>
    %c11 = arith.constant 11 : index
    %c0_36 = arith.constant 0 : index
    %38 = vector.load %arg8[%c11, %c0_36] : memref<108x8xf32, #tpu.memory_space<vmem>>, vector<80x8xf32>
    %c4 = arith.constant 4 : index
    %c0_37 = arith.constant 0 : index
    %c0_38 = arith.constant 0 : index
    %39 = vector.load %arg5[%c4, %c0_37, %c0_38] : memref<9x8x8xf32, #tpu.memory_space<vmem>>, vector<1x8x8xf32>
    %40 = vector.shape_cast %39 : vector<1x8x8xf32> to vector<8x8xf32>
    %cst_39 = arith.constant dense<0.000000e+00> : vector<80x8xf32>
    %41 = tpu.matmul %38, %40, %cst_39 {dimension_numbers = #tpu.dot_dimension_numbers<[1], [0], [0], [1], [0, 0, 1, 1], [], []>} : vector<80x8xf32>, vector<8x8xf32>, vector<80x8xf32> -> vector<80x8xf32>
    %42 = arith.addf %37, %41 : vector<80x8xf32>
    %c12 = arith.constant 12 : index
    %c0_40 = arith.constant 0 : index
    %43 = vector.load %arg8[%c12, %c0_40] : memref<108x8xf32, #tpu.memory_space<vmem>>, vector<80x8xf32>
    %c5 = arith.constant 5 : index
    %c0_41 = arith.constant 0 : index
    %c0_42 = arith.constant 0 : index
    %44 = vector.load %arg5[%c5, %c0_41, %c0_42] : memref<9x8x8xf32, #tpu.memory_space<vmem>>, vector<1x8x8xf32>
    %45 = vector.shape_cast %44 : vector<1x8x8xf32> to vector<8x8xf32>
    %cst_43 = arith.constant dense<0.000000e+00> : vector<80x8xf32>
    %46 = tpu.matmul %43, %45, %cst_43 {dimension_numbers = #tpu.dot_dimension_numbers<[1], [0], [0], [1], [0, 0, 1, 1], [], []>} : vector<80x8xf32>, vector<8x8xf32>, vector<80x8xf32> -> vector<80x8xf32>
    %47 = arith.addf %42, %46 : vector<80x8xf32>
    %c20 = arith.constant 20 : index
    %c0_44 = arith.constant 0 : index
    %48 = vector.load %arg8[%c20, %c0_44] : memref<108x8xf32, #tpu.memory_space<vmem>>, vector<80x8xf32>
    %c6 = arith.constant 6 : index
    %c0_45 = arith.constant 0 : index
    %c0_46 = arith.constant 0 : index
    %49 = vector.load %arg5[%c6, %c0_45, %c0_46] : memref<9x8x8xf32, #tpu.memory_space<vmem>>, vector<1x8x8xf32>
    %50 = vector.shape_cast %49 : vector<1x8x8xf32> to vector<8x8xf32>
    %cst_47 = arith.constant dense<0.000000e+00> : vector<80x8xf32>
    %51 = tpu.matmul %48, %50, %cst_47 {dimension_numbers = #tpu.dot_dimension_numbers<[1], [0], [0], [1], [0, 0, 1, 1], [], []>} : vector<80x8xf32>, vector<8x8xf32>, vector<80x8xf32> -> vector<80x8xf32>
    %52 = arith.addf %47, %51 : vector<80x8xf32>
    %c21 = arith.constant 21 : index
    %c0_48 = arith.constant 0 : index
    %53 = vector.load %arg8[%c21, %c0_48] : memref<108x8xf32, #tpu.memory_space<vmem>>, vector<80x8xf32>
    %c7 = arith.constant 7 : index
    %c0_49 = arith.constant 0 : index
    %c0_50 = arith.constant 0 : index
    %54 = vector.load %arg5[%c7, %c0_49, %c0_50] : memref<9x8x8xf32, #tpu.memory_space<vmem>>, vector<1x8x8xf32>
    %55 = vector.shape_cast %54 : vector<1x8x8xf32> to vector<8x8xf32>
    %cst_51 = arith.constant dense<0.000000e+00> : vector<80x8xf32>
    %56 = tpu.matmul %53, %55, %cst_51 {dimension_numbers = #tpu.dot_dimension_numbers<[1], [0], [0], [1], [0, 0, 1, 1], [], []>} : vector<80x8xf32>, vector<8x8xf32>, vector<80x8xf32> -> vector<80x8xf32>
    %57 = arith.addf %52, %56 : vector<80x8xf32>
    %c22 = arith.constant 22 : index
    %c0_52 = arith.constant 0 : index
    %58 = vector.load %arg8[%c22, %c0_52] : memref<108x8xf32, #tpu.memory_space<vmem>>, vector<80x8xf32>
    %c8 = arith.constant 8 : index
    %c0_53 = arith.constant 0 : index
    %c0_54 = arith.constant 0 : index
    %59 = vector.load %arg5[%c8, %c0_53, %c0_54] : memref<9x8x8xf32, #tpu.memory_space<vmem>>, vector<1x8x8xf32>
    %60 = vector.shape_cast %59 : vector<1x8x8xf32> to vector<8x8xf32>
    %cst_55 = arith.constant dense<0.000000e+00> : vector<80x8xf32>
    %61 = tpu.matmul %58, %60, %cst_55 {dimension_numbers = #tpu.dot_dimension_numbers<[1], [0], [0], [1], [0, 0, 1, 1], [], []>} : vector<80x8xf32>, vector<8x8xf32>, vector<80x8xf32> -> vector<80x8xf32>
    %62 = arith.addf %57, %61 : vector<80x8xf32>
    %c0_56 = arith.constant 0 : index
    %c0_57 = arith.constant 0 : index
    %63 = vector.load %arg6[%c0_56, %c0_57] : memref<1x8xf32, #tpu.memory_space<vmem>>, vector<1x8xf32>
    %64 = vector.broadcast %63 : vector<1x8xf32> to vector<80x8xf32>
    %65 = arith.addf %62, %64 : vector<80x8xf32>
    %cst_58 = arith.constant 0.000000e+00 : f32
    %cst_59 = arith.constant 6.000000e+00 : f32
    %66 = vector.broadcast %cst_58 : f32 to vector<80x8xf32>
    %67 = arith.maximumf %66, %65 : vector<80x8xf32>
    %68 = vector.broadcast %cst_59 : f32 to vector<80x8xf32>
    %69 = arith.minimumf %68, %67 : vector<80x8xf32>
    %c0_60 = arith.constant 0 : index
    %c0_61 = arith.constant 0 : index
    %c0_62 = arith.constant 0 : index
    %70 = vector.load %arg7[%c0_60, %c0_61, %c0_62] : memref<1x80x8xf32, #tpu.memory_space<vmem>>, vector<1x80x8xf32>
    %71 = vector.shape_cast %70 : vector<1x80x8xf32> to vector<80x8xf32>
    %72 = vector.shape_cast %69 : vector<80x8xf32> to vector<1x80x8xf32>
    tpu.vector_store %arg7[%c0_60, %c0_61, %c0_62], %72 {strides = array<i32>} : memref<1x80x8xf32, #tpu.memory_space<vmem>>, vector<1x80x8xf32>,
    return
  }
  func.func @transform_0(%arg0: i32) -> (i32, i32, i32) {
    %c0_i32 = arith.constant 0 : i32
    %c0_i32_0 = arith.constant 0 : i32
    %c0_i32_1 = arith.constant 0 : i32
    return %arg0, %c0_i32, %c0_i32_0 : i32, i32, i32
  }
  func.func @transform_1(%arg0: i32) -> (i32, i32) {
    %c0_i32 = arith.constant 0 : i32
    %c0_i32_0 = arith.constant 0 : i32
    %c0_i32_1 = arith.constant 0 : i32
    return %c0_i32, %c0_i32_0 : i32, i32
  }
  func.func @transform_2(%arg0: i32) -> (i32, i32) {
    %c0_i32 = arith.constant 0 : i32
    %c0_i32_0 = arith.constant 0 : i32
    %c0_i32_1 = arith.constant 0 : i32
    return %c0_i32, %c0_i32_0 : i32, i32
  }
  func.func @transform_3(%arg0: i32) -> (i32, i32) {
    %c0_i32 = arith.constant 0 : i32
    %c0_i32_0 = arith.constant 0 : i32
    %c0_i32_1 = arith.constant 0 : i32
    return %c0_i32, %c0_i32_0 : i32, i32
  }
  func.func @transform_4(%arg0: i32) -> (i32, i32, i32) {
    %c0_i32 = arith.constant 0 : i32
    %c0_i32_0 = arith.constant 0 : i32
    %c0_i32_1 = arith.constant 0 : i32
    %c0_i32_2 = arith.constant 0 : i32
    return %c0_i32, %c0_i32_0, %c0_i32_1 : i32, i32, i32
  }
  func.func @transform_5(%arg0: i32) -> (i32, i32) {
    %c0_i32 = arith.constant 0 : i32
    %c0_i32_0 = arith.constant 0 : i32
    %c0_i32_1 = arith.constant 0 : i32
    return %c0_i32, %c0_i32_0 : i32, i32
  }
  func.func @transform_6(%arg0: i32) -> (i32, i32, i32) {
    %c0_i32 = arith.constant 0 : i32
    %c0_i32_0 = arith.constant 0 : i32
    %c0_i32_1 = arith.constant 0 : i32
    return %arg0, %c0_i32, %c0_i32_0 : i32, i32, i32
  }
}

</mosaic_0001>

<llo_original>
// kernel: resblock_forward.1
$region0: #{resblock_forward.1}
  #allocation0 [shape = 'u32[]', space=smem, size = 0x4, offset = 0x4, fixed_abs, tag = 'smem constant byte address 0x4 - core index']
  #allocation1 [shape = 'u32[72,128]{1,0:T(1,128)}', space=vmem, size = 0x9000, scoped, tag = 'internal scratch']
  #allocation2 [shape = 'f32[108,8]{1,0:T(8,128)}', space=vmem, size = 0xe000, scoped, tag = 'scratch operand']
  %s0 = inlined_call_operand.vmem [shape: f32[2,100,36], index: 0, kind: input, shape index: {}]
  %s1 = inlined_call_operand.vmem [shape: f32[36,8], index: 1, kind: input, shape index: {}]
  %s2 = inlined_call_operand.vmem [shape: f32[1,8], index: 2, kind: input, shape index: {}]
  %s3 = inlined_call_operand.vmem [shape: f32[100,1], index: 3, kind: input, shape index: {}]
  %s4 = inlined_call_operand.vmem [shape: f32[9,8,8], index: 4, kind: input, shape index: {}]
  %s5 = inlined_call_operand.vmem [shape: f32[1,8], index: 5, kind: input, shape index: {}]
  %s6 = inlined_call_operand.vmem [shape: f32[2,80,8], index: 6, kind: output, shape index: {}]
  %s7 = sld [smem:[#allocation0]]
  $region57: #{resblock_forward.1} parent=0
    _
  %s9 = ssub.s32 1, %s7
  %s10 = scalar_select 0, %s9, %s7
  loop: start=0, step=1, limit=4
  $region2: #{resblock_forward.1} parent=0 // loop_pre_header
    _
  $region3: #{resblock_forward.1} parent=0 // loop_header
    %s12 = sphi 0, %s16
    %p13 = scmp.ge.s32.totalorder %s12, 4
    %s22 = sphi 0, %s24
    %s25 = sphi 0, %s22
    %s26 = sphi 0, %s25
    %s42 = sphi 0, %s26
    %s46 = sphi 0, %s46
    %s48 = sphi 0, %s46
    %s49 = sphi 0, %s48
    %s63 = sphi 0, %s49
    %s67 = sphi 0, %s67
    %s69 = sphi 0, %s67
    %s70 = sphi 0, %s69
    %s84 = sphi 0, %s70
    %s88 = sphi 0, %s88
    %s90 = sphi 0, %s88
    %s91 = sphi 0, %s90
    %s105 = sphi 0, %s91
    %s109 = sphi 0, %s109
    %s111 = sphi 0, %s109
    %s112 = sphi 0, %s111
    %s126 = sphi 0, %s112
    %s130 = sphi 0, %s130
    %s132 = sphi 0, %s130
    %s133 = sphi 0, %s132
    %s147 = sphi 0, %s133
    %s153 = sphi 0, %s155
    %s156 = sphi 0, %s153
    %s157 = sphi 0, %s156
    %s173 = sphi 0, %s157
  $region4: #{resblock_forward.1} parent=0 // loop_header_branch
    %15 = sbr.rel (%p13) target = $region8
  $region5: #{resblock_forward.1} parent=0 // loop_body
    %s17 = ssub.s32 %s12, 1
    %s18 = ssub.s32 %s12, 2
    %s19 = sadd.s32 %s12, 1
    %s20 = ssub.s32 %s12, %s19
    %p21 = scmp.eq.s32.totalorder %s20, 0
    %s23 = sadd.s32 %s22, 1
    %s24 = scalar_select %p21, %s22, %s23
    %p27 = pneg %p21
    %p28 = scmp.eq.s32.totalorder %s12, 1
    %p29 = por %p27, %p28
    %p30 = scmp.ne.s32.totalorder %s22, %s25
    %p31 = scmp.eq.s32.totalorder %s12, 0
    %p32 = por %p30, %p31
    %p33 = scmp.ne.s32.totalorder %s22, %s25
    %p34 = scmp.eq.s32.totalorder %s17, 1
    %p35 = por %p33, %p34
    %p36 = scmp.ne.s32.totalorder %s25, %s26
    %p37 = scmp.eq.s32.totalorder %s17, 0
    %p38 = por %p36, %p37
    %p39 = scmp.ne.s32.totalorder %s25, %s26
    %p40 = scmp.eq.s32.totalorder %s18, 1
    %p41 = por %p39, %p40
    %p43 = scmp.ne.s32.totalorder %s26, %s42
    %p44 = scmp.eq.s32.totalorder %s18, 0
    %p45 = por %p43, %p44
    %s47 = sadd.s32 %s46, 1
    %p50 = scmp.eq.s32.totalorder %s12, 1
    %p51 = scmp.ne.s32.totalorder %s46, %s48
    %p52 = scmp.eq.s32.totalorder %s12, 0
    %p53 = por %p51, %p52
    %p54 = scmp.ne.s32.totalorder %s46, %s48
    %p55 = scmp.eq.s32.totalorder %s17, 1
    %p56 = por %p54, %p55
    %p57 = scmp.ne.s32.totalorder %s48, %s49
    %p58 = scmp.eq.s32.totalorder %s17, 0
    %p59 = por %p57, %p58
    %p60 = scmp.ne.s32.totalorder %s48, %s49
    %p61 = scmp.eq.s32.totalorder %s18, 1
    %p62 = por %p60, %p61
    %p64 = scmp.ne.s32.totalorder %s49, %s63
    %p65 = scmp.eq.s32.totalorder %s18, 0
    %p66 = por %p64, %p65
    %s68 = sadd.s32 %s67, 1
    %p71 = scmp.eq.s32.totalorder %s12, 1
    %p72 = scmp.ne.s32.totalorder %s67, %s69
    %p73 = scmp.eq.s32.totalorder %s12, 0
    %p74 = por %p72, %p73
    %p75 = scmp.ne.s32.totalorder %s67, %s69
    %p76 = scmp.eq.s32.totalorder %s17, 1
    %p77 = por %p75, %p76
    %p78 = scmp.ne.s32.totalorder %s69, %s70
    %p79 = scmp.eq.s32.totalorder %s17, 0
    %p80 = por %p78, %p79
    %p81 = scmp.ne.s32.totalorder %s69, %s70
    %p82 = scmp.eq.s32.totalorder %s18, 1
    %p83 = por %p81, %p82
    %p85 = scmp.ne.s32.totalorder %s70, %s84
    %p86 = scmp.eq.s32.totalorder %s18, 0
    %p87 = por %p85, %p86
    %s89 = sadd.s32 %s88, 1
    %p92 = scmp.eq.s32.totalorder %s12, 1
    %p93 = scmp.ne.s32.totalorder %s88, %s90
    %p94 = scmp.eq.s32.totalorder %s12, 0
    %p95 = por %p93, %p94
    %p96 = scmp.ne.s32.totalorder %s88, %s90
    %p97 = scmp.eq.s32.totalorder %s17, 1
    %p98 = por %p96, %p97
    %p99 = scmp.ne.s32.totalorder %s90, %s91
    %p100 = scmp.eq.s32.totalorder %s17, 0
    %p101 = por %p99, %p100
    %p102 = scmp.ne.s32.totalorder %s90, %s91
    %p103 = scmp.eq.s32.totalorder %s18, 1
    %p104 = por %p102, %p103
    %p106 = scmp.ne.s32.totalorder %s91, %s105
    %p107 = scmp.eq.s32.totalorder %s18, 0
    %p108 = por %p106, %p107
    %s110 = sadd.s32 %s109, 1
    %p113 = scmp.eq.s32.totalorder %s12, 1
    %p114 = scmp.ne.s32.totalorder %s109, %s111
    %p115 = scmp.eq.s32.totalorder %s12, 0
    %p116 = por %p114, %p115
    %p117 = scmp.ne.s32.totalorder %s109, %s111
    %p118 = scmp.eq.s32.totalorder %s17, 1
    %p119 = por %p117, %p118
    %p120 = scmp.ne.s32.totalorder %s111, %s112
    %p121 = scmp.eq.s32.totalorder %s17, 0
    %p122 = por %p120, %p121
    %p123 = scmp.ne.s32.totalorder %s111, %s112
    %p124 = scmp.eq.s32.totalorder %s18, 1
    %p125 = por %p123, %p124
    %p127 = scmp.ne.s32.totalorder %s112, %s126
    %p128 = scmp.eq.s32.totalorder %s18, 0
    %p129 = por %p127, %p128
    %s131 = sadd.s32 %s130, 1
    %p134 = scmp.eq.s32.totalorder %s12, 1
    %p135 = scmp.ne.s32.totalorder %s130, %s132
    %p136 = scmp.eq.s32.totalorder %s12, 0
    %p137 = por %p135, %p136
    %p138 = scmp.ne.s32.totalorder %s130, %s132
    %p139 = scmp.eq.s32.totalorder %s17, 1
    %p140 = por %p138, %p139
    %p141 = scmp.ne.s32.totalorder %s132, %s133
    %p142 = scmp.eq.s32.totalorder %s17, 0
    %p143 = por %p141, %p142
    %p144 = scmp.ne.s32.totalorder %s132, %s133
    %p145 = scmp.eq.s32.totalorder %s18, 1
    %p146 = por %p144, %p145
    %p148 = scmp.ne.s32.totalorder %s133, %s147
    %p149 = scmp.eq.s32.totalorder %s18, 0
    %p150 = por %p148, %p149
    %s151 = ssub.s32 %s12, %s19
    %p152 = scmp.eq.s32.totalorder %s151, 0
    %s154 = sadd.s32 %s153, 1
    %s155 = scalar_select %p152, %s153, %s154
    %p158 = pneg %p152
    %p159 = scmp.eq.s32.totalorder %s12, 1
    %p160 = por %p158, %p159
    %p161 = scmp.ne.s32.totalorder %s153, %s156
    %p162 = scmp.eq.s32.totalorder %s12, 0
    %p163 = por %p161, %p162
    %p164 = scmp.ne.s32.totalorder %s153, %s156
    %p165 = scmp.eq.s32.totalorder %s17, 1
    %p166 = por %p164, %p165
    %p167 = scmp.ne.s32.totalorder %s156, %s157
    %p168 = scmp.eq.s32.totalorder %s17, 0
    %p169 = por %p167, %p168
    %p170 = scmp.ne.s32.totalorder %s156, %s157
    %p171 = scmp.eq.s32.totalorder %s18, 1
    %p172 = por %p170, %p171
    %p174 = scmp.ne.s32.totalorder %s157, %s173
    %p175 = scmp.eq.s32.totalorder %s18, 0
    %p176 = por %p174, %p175
    %p177 = scmp.le.s32.totalorder 1, %s12
    %p178 = scmp.lt.s32.totalorder %s12, 3
    %p179 = pnand %p177, %p178
    %p180 = pneg %p179
    // Predicated region
    $region9: #{resblock_forward.1} parent=5 // pred_check
      _
    $region10: #{resblock_forward.1} parent=5 // pred_check_branch
      %182 = sbr.rel (%p179) target = $region12
    $region11: #{resblock_forward.1} parent=5 // pred_region
      %s183 = ssub.s32 %s12, 1
      // Predicated region
      $region13: #{resblock_forward.1} parent=11 // pred_check
        %p184 = pneg %p59
      $region14: #{resblock_forward.1} parent=11 // pred_check_branch
        %186 = sbr.rel (%p184) target = $region16
      $region15: #{resblock_forward.1} parent=11 // pred_region
        _
      $region16: #{resblock_forward.1} parent=11 // pred_fallthru
        _
      // Predicated region
      $region17: #{resblock_forward.1} parent=11 // pred_check
        %p187 = pneg %p80
      $region18: #{resblock_forward.1} parent=11 // pred_check_branch
        %189 = sbr.rel (%p187) target = $region20
      $region19: #{resblock_forward.1} parent=11 // pred_region
        _
      $region20: #{resblock_forward.1} parent=11 // pred_fallthru
        _
      // Predicated region
      $region21: #{resblock_forward.1} parent=11 // pred_check
        %p190 = pneg %p101
      $region22: #{resblock_forward.1} parent=11 // pred_check_branch
        %192 = sbr.rel (%p190) target = $region24
      $region23: #{resblock_forward.1} parent=11 // pred_region
        _
      $region24: #{resblock_forward.1} parent=11 // pred_fallthru
        _
      // Predicated region
      $region25: #{resblock_forward.1} parent=11 // pred_check
        %p193 = pneg %p122
      $region26: #{resblock_forward.1} parent=11 // pred_check_branch
        %195 = sbr.rel (%p193) target = $region28
      $region27: #{resblock_forward.1} parent=11 // pred_region
        _
      $region28: #{resblock_forward.1} parent=11 // pred_fallthru
        _
      // Predicated region
      $region29: #{resblock_forward.1} parent=11 // pred_check
        %p196 = pneg %p143
      $region30: #{resblock_forward.1} parent=11 // pred_check_branch
        %198 = sbr.rel (%p196) target = $region32
      $region31: #{resblock_forward.1} parent=11 // pred_region
        _
      $region32: #{resblock_forward.1} parent=11 // pred_fallthru
        _
    $region12: #{resblock_forward.1} parent=5 // pred_fallthru
      _
    %p199 = scmp.lt.s32.totalorder %s12, 2
    // Predicated region
    $region33: #{resblock_forward.1} parent=5 // pred_check
      %p200 = pneg %p199
    $region34: #{resblock_forward.1} parent=5 // pred_check_branch
      %202 = sbr.rel (%p200) target = $region36
    $region35: #{resblock_forward.1} parent=5 // pred_region
      // Predicated region
      $region37: #{resblock_forward.1} parent=35 // pred_check
        %p203 = pneg %p32
      $region38: #{resblock_forward.1} parent=35 // pred_check_branch
        %205 = sbr.rel (%p203) target = $region40
      $region39: #{resblock_forward.1} parent=35 // pred_region
        %p206 = scmp.lt.s32.totalorder %s12, 1
        %s207 = scalar_select %p206, %s12, 1
        %s208 = smul.addr %s207, 13
        %s209 = smul.addr %s208, 8
        %s210 = scalar_lea.vmem %s0, %s209
      $region40: #{resblock_forward.1} parent=35 // pred_fallthru
        _
    $region36: #{resblock_forward.1} parent=5 // pred_fallthru
      _
    %p211 = scmp.le.s32.totalorder 1, %s12
    %p212 = scmp.lt.s32.totalorder %s12, 3
    %p213 = pnand %p211, %p212
    %p214 = pneg %p213
    // Predicated region
    $region41: #{resblock_forward.1} parent=5 // pred_check
      _
    $region42: #{resblock_forward.1} parent=5 // pred_check_branch
      %216 = sbr.rel (%p213) target = $region44
    $region43: #{resblock_forward.1} parent=5 // pred_region
      %s217 = ssub.s32 %s12, 1
      %p218 = scmp.lt.s32.totalorder %s17, 1
      %s219 = scalar_select %p218, %s17, 1
      %s220 = smul.addr %s219, 13
      %s221 = smul.addr %s220, 8
      %s222 = scalar_lea.vmem %s0, %s221
      %p223 = pneg %p38
      %p224 = pneg %p35
      %p225 = pneg %p59
      %p226 = pneg %p56
      %p227 = pneg %p80
      %p228 = pneg %p77
      %p229 = pneg %p101
      %p230 = pneg %p98
      %p231 = pneg %p122
      %p232 = pneg %p119
      %p233 = pneg %p143
      %p234 = pneg %p140
      %p235 = pneg %p169
      %p236 = pneg %p166
      %p237 = scmp.lt.s32.totalorder %s17, 1
      %s238 = scalar_select %p237, %s17, 1
      %s239 = smul.addr %s238, 10
      %s240 = smul.addr %s239, 8
      %s241 = scalar_lea.vmem %s6, %s240
      %p242 = scmp.lt.s32.totalorder %s17, 1
      %s243 = scalar_select %p242, %s17, 1
      %s244 = smul.addr %s243, 13
      %s245 = smul.addr %s244, 8
      %s246 = scalar_lea.vmem %s0, %s245
      %p247 = scmp.lt.s32.totalorder %s17, 1
      %s248 = scalar_select %p247, %s17, 1
      %s249 = smul.addr %s248, 10
      %s250 = smul.addr %s249, 8
      %s251 = scalar_lea.vmem %s6, %s250
      %v252 = vld [vmem:[%s246] sm:$0xff]
      %v253 = vld [vmem:[%s246 + $0x8] sm:$0xff]
      %v254 = vld [vmem:[%s246 + $0x10] sm:$0xff]
      %v255 = vld [vmem:[%s246 + $0x18] sm:$0xff]
      %v256 = vld [vmem:[%s246 + $0x20] sm:$0xff]
      %v257 = vld [vmem:[%s246 + $0x28] sm:$0xff]
      %v258 = vld [vmem:[%s246 + $0x30] sm:$0xff]
      %v259 = vld [vmem:[%s246 + $0x38] sm:$0xff]
      %v260 = vld [vmem:[%s246 + $0x40] sm:$0xff]
      %v261 = vld [vmem:[%s246 + $0x48] sm:$0xff]
      %v262 = vld [vmem:[%s246 + $0x50] sm:$0xff]
      %v263 = vld [vmem:[%s246 + $0x58] sm:$0xff]
      %v264 = vld [vmem:[%s246 + $0x60] sm:$0xf]
      %v265 = vld [vmem:[%s1] sm:$0xff]
      %v266 = vld [vmem:[%s1 + $0x8] sm:$0xff]
      %v267 = vld [vmem:[%s1 + $0x10] sm:$0xff]
      %v268 = vld [vmem:[%s1 + $0x18] sm:$0xff]
      %v269 = vld [vmem:[%s1 + $0x20] sm:$0xf]
      %v270 = vld [vmem:[%s2] sm:$0x1]
      %v272 = vperm.slane %v270, 0
      %vm274 = vcmask 293888
      %v276 = vsel %vm274, %v252, 0
      %v279 = vsel %vm274, %v253, 0
      %v282 = vsel %vm274, %v254, 0
      %v285 = vsel %vm274, %v255, 0
      %v288 = vsel %vm274, %v256, 0
      %v291 = vsel %vm274, %v257, 0
      %v294 = vsel %vm274, %v258, 0
      %v297 = vsel %vm274, %v259, 0
      %v300 = vsel %vm274, %v260, 0
      %v303 = vsel %vm274, %v261, 0
      %v306 = vsel %vm274, %v262, 0
      %v309 = vsel %vm274, %v263, 0
      %v312 = vsel %vm274, %v264, 0
      %vm314 = vcmask 1043456
      %v316 = vsel %vm314, %v269, 0
      %318 = vmatpush.msra.mxu0 0.0
      %319 = vmatpush.msra.mxu0 0.0
      %320 = vmatpush.msra.mxu0 0.0
      %321 = vmatpush.msra.mxu0 0.0
      %322 = vmatpush.msra.mxu0 0.0
      %323 = vmatpush.msra.mxu0 0.0
      %324 = vmatpush.msra.mxu0 0.0
      %325 = vmatpush.msra.mxu0 0.0
      %326 = vmatpush.msra.mxu0 0.0
      %327 = vmatpush.msra.mxu0 0.0
      %328 = vmatpush.msra.mxu0 0.0
      %329 = vmatpush.msra.mxu0 %v316
      %330 = vmatpush.msra.mxu0 %v268
      %331 = vmatpush.msra.mxu0 %v267
      %332 = vmatpush.msra.mxu0 %v266
      %333 = vmatpush.msra.mxu0 %v265
      %334 = vmatmul.f32.gmra.mxu0 %v276
      %v335 = vpop.f32.mrf.mxu0
      %v336 = vadd.f32 %v272, %v335
      %337 = vmatmul.f32.gmra.mxu0 %v279
      %v338 = vpop.f32.mrf.mxu0
      %v339 = vadd.f32 %v272, %v338
      %340 = vmatmul.f32.gmra.mxu0 %v282
      %v341 = vpop.f32.mrf.mxu0
      %v342 = vadd.f32 %v272, %v341
      %343 = vmatmul.f32.gmra.mxu0 %v285
      %v344 = vpop.f32.mrf.mxu0
      %v345 = vadd.f32 %v272, %v344
      %346 = vmatmul.f32.gmra.mxu0 %v288
      %v347 = vpop.f32.mrf.mxu0
      %v348 = vadd.f32 %v272, %v347
      %349 = vmatmul.f32.gmra.mxu0 %v291
      %v350 = vpop.f32.mrf.mxu0
      %v351 = vadd.f32 %v272, %v350
      %352 = vmatmul.f32.gmra.mxu0 %v294
      %v353 = vpop.f32.mrf.mxu0
      %v354 = vadd.f32 %v272, %v353
      %355 = vmatmul.f32.gmra.mxu0 %v297
      %v356 = vpop.f32.mrf.mxu0
      %v357 = vadd.f32 %v272, %v356
      %358 = vmatmul.f32.gmra.mxu0 %v300
      %v359 = vpop.f32.mrf.mxu0
      %v360 = vadd.f32 %v272, %v359
      %361 = vmatmul.f32.gmra.mxu0 %v303
      %v362 = vpop.f32.mrf.mxu0
      %v363 = vadd.f32 %v272, %v362
      %364 = vmatmul.f32.gmra.mxu0 %v306
      %v365 = vpop.f32.mrf.mxu0
      %v366 = vadd.f32 %v272, %v365
      %367 = vmatmul.f32.gmra.mxu0 %v309
      %v368 = vpop.f32.mrf.mxu0
      %v369 = vadd.f32 %v272, %v368
      %370 = vmatmul.f32.gmra.mxu0 %v312
      %v371 = vpop.f32.mrf.mxu0
      %v372 = vadd.f32 %v272, %v371
      %373 = vdwg.mxu0
      %v374 = vmax.f32 %v336, 0.0
      %v375 = vmax.f32 %v339, 0.0
      %v376 = vmax.f32 %v342, 0.0
      %v377 = vmax.f32 %v345, 0.0
      %v378 = vmax.f32 %v348, 0.0
      %v379 = vmax.f32 %v351, 0.0
      %v380 = vmax.f32 %v354, 0.0
      %v381 = vmax.f32 %v357, 0.0
      %v382 = vmax.f32 %v360, 0.0
      %v383 = vmax.f32 %v363, 0.0
      %v384 = vmax.f32 %v366, 0.0
      %v385 = vmax.f32 %v369, 0.0
      %v386 = vmax.f32 %v372, 0.0
      %v387 = vmin.f32 %v374, 6.0
      %v388 = vmin.f32 %v375, 6.0
      %v389 = vmin.f32 %v376, 6.0
      %v390 = vmin.f32 %v377, 6.0
      %v391 = vmin.f32 %v378, 6.0
      %v392 = vmin.f32 %v379, 6.0
      %v393 = vmin.f32 %v380, 6.0
      %v394 = vmin.f32 %v381, 6.0
      %v395 = vmin.f32 %v382, 6.0
      %v396 = vmin.f32 %v383, 6.0
      %v397 = vmin.f32 %v384, 6.0
      %v398 = vmin.f32 %v385, 6.0
      %v399 = vmin.f32 %v386, 6.0
      %v400 = vld [vmem:[%s3] sm:$0xff]
      %v401 = vld [vmem:[%s3 + $0x8] sm:$0xff]
      %v402 = vld [vmem:[%s3 + $0x10] sm:$0xff]
      %v403 = vld [vmem:[%s3 + $0x18] sm:$0xff]
      %v404 = vld [vmem:[%s3 + $0x20] sm:$0xff]
      %v405 = vld [vmem:[%s3 + $0x28] sm:$0xff]
      %v406 = vld [vmem:[%s3 + $0x30] sm:$0xff]
      %v407 = vld [vmem:[%s3 + $0x38] sm:$0xff]
      %v408 = vld [vmem:[%s3 + $0x40] sm:$0xff]
      %v409 = vld [vmem:[%s3 + $0x48] sm:$0xff]
      %v410 = vld [vmem:[%s3 + $0x50] sm:$0xff]
      %v411 = vld [vmem:[%s3 + $0x58] sm:$0xff]
      %v412 = vld [vmem:[%s3 + $0x60] sm:$0xf]
      %414 = vset.pattern.permute.xlu0 0
      %415 = vperm.xlu0 %414, %v400
      %v416 = vpop.permute.xlu0 %415
      %419 = vset.pattern.permute.xlu0 0
      %420 = vperm.xlu0 %419, %v401
      %v421 = vpop.permute.xlu0 %420
      %424 = vset.pattern.permute.xlu0 0
      %425 = vperm.xlu0 %424, %v402
      %v426 = vpop.permute.xlu0 %425
      %429 = vset.pattern.permute.xlu0 0
      %430 = vperm.xlu0 %429, %v403
      %v431 = vpop.permute.xlu0 %430
      %434 = vset.pattern.permute.xlu0 0
      %435 = vperm.xlu0 %434, %v404
      %v436 = vpop.permute.xlu0 %435
      %439 = vset.pattern.permute.xlu0 0
      %440 = vperm.xlu0 %439, %v405
      %v441 = vpop.permute.xlu0 %440
      %444 = vset.pattern.permute.xlu0 0
      %445 = vperm.xlu0 %444, %v406
      %v446 = vpop.permute.xlu0 %445
      %449 = vset.pattern.permute.xlu0 0
      %450 = vperm.xlu0 %449, %v407
      %v451 = vpop.permute.xlu0 %450
      %454 = vset.pattern.permute.xlu0 0
      %455 = vperm.xlu0 %454, %v408
      %v456 = vpop.permute.xlu0 %455
      %459 = vset.pattern.permute.xlu0 0
      %460 = vperm.xlu0 %459, %v409
      %v461 = vpop.permute.xlu0 %460
      %464 = vset.pattern.permute.xlu0 0
      %465 = vperm.xlu0 %464, %v410
      %v466 = vpop.permute.xlu0 %465
      %469 = vset.pattern.permute.xlu0 0
      %470 = vperm.xlu0 %469, %v411
      %v471 = vpop.permute.xlu0 %470
      %474 = vset.pattern.permute.xlu0 0
      %475 = vperm.xlu0 %474, %v412
      %v476 = vpop.permute.xlu0 %475
      %v478 = vmul.f32 %v387, %v416
      %v479 = vmul.f32 %v388, %v421
      %v480 = vmul.f32 %v389, %v426
      %v481 = vmul.f32 %v390, %v431
      %v482 = vmul.f32 %v391, %v436
      %v483 = vmul.f32 %v392, %v441
      %v484 = vmul.f32 %v393, %v446
      %v485 = vmul.f32 %v394, %v451
      %v486 = vmul.f32 %v395, %v456
      %v487 = vmul.f32 %v396, %v461
      %v488 = vmul.f32 %v397, %v466
      %v489 = vmul.f32 %v398, %v471
      %v490 = vmul.f32 %v399, %v476
      %vm491 = vcmask 64512
      %492 = vst.msk [vmem:[#allocation2] sm:$0xff] %vm491, 0.0
      %493 = vst.msk [vmem:[#allocation2 + $0x8] sm:$0xff] %vm491, 0.0
      %494 = vst.msk [vmem:[#allocation2 + $0x10] sm:$0xff] %vm491, 0.0
      %495 = vst.msk [vmem:[#allocation2 + $0x18] sm:$0xff] %vm491, 0.0
      %496 = vst.msk [vmem:[#allocation2 + $0x20] sm:$0xff] %vm491, 0.0
      %497 = vst.msk [vmem:[#allocation2 + $0x28] sm:$0xff] %vm491, 0.0
      %498 = vst.msk [vmem:[#allocation2 + $0x30] sm:$0xff] %vm491, 0.0
      %499 = vst.msk [vmem:[#allocation2 + $0x38] sm:$0xff] %vm491, 0.0
      %500 = vst.msk [vmem:[#allocation2 + $0x40] sm:$0xff] %vm491, 0.0
      %501 = vst.msk [vmem:[#allocation2 + $0x48] sm:$0xff] %vm491, 0.0
      %502 = vst.msk [vmem:[#allocation2 + $0x50] sm:$0xff] %vm491, 0.0
      %503 = vst.msk [vmem:[#allocation2 + $0x58] sm:$0xff] %vm491, 0.0
      %504 = vst.msk [vmem:[#allocation2 + $0x60] sm:$0xff] %vm491, 0.0
      %vm505 = vcmask 60416
      %506 = vst.msk [vmem:[#allocation2 + $0x68] sm:$0xf] %vm505, 0.0
      %507 = vst.msk [vmem:[#allocation2] sm:$0xff] %vm491, %v478
      %508 = vst.msk [vmem:[#allocation2 + $0x8] sm:$0xff] %vm491, %v479
      %509 = vst.msk [vmem:[#allocation2 + $0x10] sm:$0xff] %vm491, %v480
      %510 = vst.msk [vmem:[#allocation2 + $0x18] sm:$0xff] %vm491, %v481
      %511 = vst.msk [vmem:[#allocation2 + $0x20] sm:$0xff] %vm491, %v482
      %512 = vst.msk [vmem:[#allocation2 + $0x28] sm:$0xff] %vm491, %v483
      %513 = vst.msk [vmem:[#allocation2 + $0x30] sm:$0xff] %vm491, %v484
      %514 = vst.msk [vmem:[#allocation2 + $0x38] sm:$0xff] %vm491, %v485
      %515 = vst.msk [vmem:[#allocation2 + $0x40] sm:$0xff] %vm491, %v486
      %516 = vst.msk [vmem:[#allocation2 + $0x48] sm:$0xff] %vm491, %v487
      %517 = vst.msk [vmem:[#allocation2 + $0x50] sm:$0xff] %vm491, %v488
      %518 = vst.msk [vmem:[#allocation2 + $0x58] sm:$0xff] %vm491, %v489
      %519 = vst.msk [vmem:[#allocation2 + $0x60] sm:$0xf] %vm505, %v490
      %v520 = vld [vmem:[#allocation2] sm:$0xff]
      %v521 = vld [vmem:[#allocation2 + $0x8] sm:$0xff]
      %v522 = vld [vmem:[#allocation2 + $0x10] sm:$0xff]
      %v523 = vld [vmem:[#allocation2 + $0x18] sm:$0xff]
      %v524 = vld [vmem:[#allocation2 + $0x20] sm:$0xff]
      %v525 = vld [vmem:[#allocation2 + $0x28] sm:$0xff]
      %v526 = vld [vmem:[#allocation2 + $0x30] sm:$0xff]
      %v527 = vld [vmem:[#allocation2 + $0x38] sm:$0xff]
      %v528 = vld [vmem:[#allocation2 + $0x40] sm:$0xff]
      %v529 = vld [vmem:[#allocation2 + $0x48] sm:$0xff]
      %v530 = vld [vmem:[%s4] sm:$0xff]
      %v531 = vld [vmem:[#allocation2 + $0x1] sm:$0xff]
      %v532 = vld [vmem:[#allocation2 + $0x9] sm:$0xff]
      %v533 = vld [vmem:[#allocation2 + $0x11] sm:$0xff]
      %v534 = vld [vmem:[#allocation2 + $0x19] sm:$0xff]
      %v535 = vld [vmem:[#allocation2 + $0x21] sm:$0xff]
      %v536 = vld [vmem:[#allocation2 + $0x29] sm:$0xff]
      %v537 = vld [vmem:[#allocation2 + $0x31] sm:$0xff]
      %v538 = vld [vmem:[#allocation2 + $0x39] sm:$0xff]
      %v539 = vld [vmem:[#allocation2 + $0x41] sm:$0xff]
      %v540 = vld [vmem:[#allocation2 + $0x49] sm:$0xff]
      %s541 = scalar_lea.vmem %s4, 8
      %v542 = vld [vmem:[%s541] sm:$0xff]
      %v544 = vsel %vm491, %v531, 0
      %v547 = vsel %vm491, %v532, 0
      %v550 = vsel %vm491, %v533, 0
      %v553 = vsel %vm491, %v534, 0
      %v556 = vsel %vm491, %v535, 0
      %v559 = vsel %vm491, %v536, 0
      %v562 = vsel %vm491, %v537, 0
      %v565 = vsel %vm491, %v538, 0
      %v568 = vsel %vm491, %v539, 0
      %v571 = vsel %vm491, %v540, 0
      %573 = vmatpush.msra.mxu0 0.0
      %574 = vmatpush.msra.mxu0 0.0
      %575 = vmatpush.msra.mxu0 0.0
      %576 = vmatpush.msra.mxu0 0.0
      %577 = vmatpush.msra.mxu0 0.0
      %578 = vmatpush.msra.mxu0 0.0
      %579 = vmatpush.msra.mxu0 0.0
      %580 = vmatpush.msra.mxu0 0.0
      %581 = vmatpush.msra.mxu0 0.0
      %582 = vmatpush.msra.mxu0 0.0
      %583 = vmatpush.msra.mxu0 0.0
      %584 = vmatpush.msra.mxu0 0.0
      %585 = vmatpush.msra.mxu0 0.0
      %586 = vmatpush.msra.mxu0 0.0
      %587 = vmatpush.msra.mxu0 0.0
      %588 = vmatpush.msra.mxu0 %v542
      %589 = vmatmul.f32.gmra.mxu0 %v544
      %v590 = vpop.f32.mrf.mxu0
      %v591 = vadd.f32 0.0, %v590
      %592 = vmatmul.f32.gmra.mxu0 %v547
      %v593 = vpop.f32.mrf.mxu0
      %v594 = vadd.f32 0.0, %v593
      %595 = vmatmul.f32.gmra.mxu0 %v550
      %v596 = vpop.f32.mrf.mxu0
      %v597 = vadd.f32 0.0, %v596
      %598 = vmatmul.f32.gmra.mxu0 %v553
      %v599 = vpop.f32.mrf.mxu0
      %v600 = vadd.f32 0.0, %v599
      %601 = vmatmul.f32.gmra.mxu0 %v556
      %v602 = vpop.f32.mrf.mxu0
      %v603 = vadd.f32 0.0, %v602
      %604 = vmatmul.f32.gmra.mxu0 %v559
      %v605 = vpop.f32.mrf.mxu0
      %v606 = vadd.f32 0.0, %v605
      %607 = vmatmul.f32.gmra.mxu0 %v562
      %v608 = vpop.f32.mrf.mxu0
      %v609 = vadd.f32 0.0, %v608
      %610 = vmatmul.f32.gmra.mxu0 %v565
      %v611 = vpop.f32.mrf.mxu0
      %v612 = vadd.f32 0.0, %v611
      %613 = vmatmul.f32.gmra.mxu0 %v568
      %v614 = vpop.f32.mrf.mxu0
      %v615 = vadd.f32 0.0, %v614
      %616 = vmatmul.f32.gmra.mxu0 %v571
      %v617 = vpop.f32.mrf.mxu0
      %v618 = vadd.f32 0.0, %v617
      %619 = vdwg.mxu0
      %v621 = vsel %vm491, %v520, 0
      %v624 = vsel %vm491, %v521, 0
      %v627 = vsel %vm491, %v522, 0
      %v630 = vsel %vm491, %v523, 0
      %v633 = vsel %vm491, %v524, 0
      %v636 = vsel %vm491, %v525, 0
      %v639 = vsel %vm491, %v526, 0
      %v642 = vsel %vm491, %v527, 0
      %v645 = vsel %vm491, %v528, 0
      %v648 = vsel %vm491, %v529, 0
      %650 = vmatpush.msra.mxu0 0.0
      %651 = vmatpush.msra.mxu0 0.0
      %652 = vmatpush.msra.mxu0 0.0
      %653 = vmatpush.msra.mxu0 0.0
      %654 = vmatpush.msra.mxu0 0.0
      %655 = vmatpush.msra.mxu0 0.0
      %656 = vmatpush.msra.mxu0 0.0
      %657 = vmatpush.msra.mxu0 0.0
      %658 = vmatpush.msra.mxu0 0.0
      %659 = vmatpush.msra.mxu0 0.0
      %660 = vmatpush.msra.mxu0 0.0
      %661 = vmatpush.msra.mxu0 0.0
      %662 = vmatpush.msra.mxu0 0.0
      %663 = vmatpush.msra.mxu0 0.0
      %664 = vmatpush.msra.mxu0 0.0
      %665 = vmatpush.msra.mxu0 %v530
      %666 = vmatmul.f32.gmra.mxu0 %v621
      %v667 = vpop.f32.mrf.mxu0
      %v668 = vadd.f32 %v591, %v667
      %669 = vmatmul.f32.gmra.mxu0 %v624
      %v670 = vpop.f32.mrf.mxu0
      %v671 = vadd.f32 %v594, %v670
      %672 = vmatmul.f32.gmra.mxu0 %v627
      %v673 = vpop.f32.mrf.mxu0
      %v674 = vadd.f32 %v597, %v673
      %675 = vmatmul.f32.gmra.mxu0 %v630
      %v676 = vpop.f32.mrf.mxu0
      %v677 = vadd.f32 %v600, %v676
      %678 = vmatmul.f32.gmra.mxu0 %v633
      %v679 = vpop.f32.mrf.mxu0
      %v680 = vadd.f32 %v603, %v679
      %681 = vmatmul.f32.gmra.mxu0 %v636
      %v682 = vpop.f32.mrf.mxu0
      %v683 = vadd.f32 %v606, %v682
      %684 = vmatmul.f32.gmra.mxu0 %v639
      %v685 = vpop.f32.mrf.mxu0
      %v686 = vadd.f32 %v609, %v685
      %687 = vmatmul.f32.gmra.mxu0 %v642
      %v688 = vpop.f32.mrf.mxu0
      %v689 = vadd.f32 %v612, %v688
      %690 = vmatmul.f32.gmra.mxu0 %v645
      %v691 = vpop.f32.mrf.mxu0
      %v692 = vadd.f32 %v615, %v691
      %693 = vmatmul.f32.gmra.mxu0 %v648
      %v694 = vpop.f32.mrf.mxu0
      %v695 = vadd.f32 %v618, %v694
      %696 = vdwg.mxu0
      %v697 = vld [vmem:[#allocation2 + $0x2] sm:$0xff]
      %v698 = vld [vmem:[#allocation2 + $0xa] sm:$0xff]
      %v699 = vld [vmem:[#allocation2 + $0x12] sm:$0xff]
      %v700 = vld [vmem:[#allocation2 + $0x1a] sm:$0xff]
      %v701 = vld [vmem:[#allocation2 + $0x22] sm:$0xff]
      %v702 = vld [vmem:[#allocation2 + $0x2a] sm:$0xff]
      %v703 = vld [vmem:[#allocation2 + $0x32] sm:$0xff]
      %v704 = vld [vmem:[#allocation2 + $0x3a] sm:$0xff]
      %v705 = vld [vmem:[#allocation2 + $0x42] sm:$0xff]
      %v706 = vld [vmem:[#allocation2 + $0x4a] sm:$0xff]
      %s707 = scalar_lea.vmem %s4, 16
      %v708 = vld [vmem:[%s707] sm:$0xff]
      %v710 = vsel %vm491, %v697, 0
      %v713 = vsel %vm491, %v698, 0
      %v716 = vsel %vm491, %v699, 0
      %v719 = vsel %vm491, %v700, 0
      %v722 = vsel %vm491, %v701, 0
      %v725 = vsel %vm491, %v702, 0
      %v728 = vsel %vm491, %v703, 0
      %v731 = vsel %vm491, %v704, 0
      %v734 = vsel %vm491, %v705, 0
      %v737 = vsel %vm491, %v706, 0
      %739 = vmatpush.msra.mxu0 0.0
      %740 = vmatpush.msra.mxu0 0.0
      %741 = vmatpush.msra.mxu0 0.0
      %742 = vmatpush.msra.mxu0 0.0
      %743 = vmatpush.msra.mxu0 0.0
      %744 = vmatpush.msra.mxu0 0.0
      %745 = vmatpush.msra.mxu0 0.0
      %746 = vmatpush.msra.mxu0 0.0
      %747 = vmatpush.msra.mxu0 0.0
      %748 = vmatpush.msra.mxu0 0.0
      %749 = vmatpush.msra.mxu0 0.0
      %750 = vmatpush.msra.mxu0 0.0
      %751 = vmatpush.msra.mxu0 0.0
      %752 = vmatpush.msra.mxu0 0.0
      %753 = vmatpush.msra.mxu0 0.0
      %754 = vmatpush.msra.mxu0 %v708
      %755 = vmatmul.f32.gmra.mxu0 %v710
      %v756 = vpop.f32.mrf.mxu0
      %v757 = vadd.f32 0.0, %v756
      %758 = vmatmul.f32.gmra.mxu0 %v713
      %v759 = vpop.f32.mrf.mxu0
      %v760 = vadd.f32 0.0, %v759
      %761 = vmatmul.f32.gmra.mxu0 %v716
      %v762 = vpop.f32.mrf.mxu0
      %v763 = vadd.f32 0.0, %v762
      %764 = vmatmul.f32.gmra.mxu0 %v719
      %v765 = vpop.f32.mrf.mxu0
      %v766 = vadd.f32 0.0, %v765
      %767 = vmatmul.f32.gmra.mxu0 %v722
      %v768 = vpop.f32.mrf.mxu0
      %v769 = vadd.f32 0.0, %v768
      %770 = vmatmul.f32.gmra.mxu0 %v725
      %v771 = vpop.f32.mrf.mxu0
      %v772 = vadd.f32 0.0, %v771
      %773 = vmatmul.f32.gmra.mxu0 %v728
      %v774 = vpop.f32.mrf.mxu0
      %v775 = vadd.f32 0.0, %v774
      %776 = vmatmul.f32.gmra.mxu0 %v731
      %v777 = vpop.f32.mrf.mxu0
      %v778 = vadd.f32 0.0, %v777
      %779 = vmatmul.f32.gmra.mxu0 %v734
      %v780 = vpop.f32.mrf.mxu0
      %v781 = vadd.f32 0.0, %v780
      %782 = vmatmul.f32.gmra.mxu0 %v737
      %v783 = vpop.f32.mrf.mxu0
      %v784 = vadd.f32 0.0, %v783
      %785 = vdwg.mxu0
      %v786 = vadd.f32 %v668, %v757
      %v787 = vadd.f32 %v671, %v760
      %v788 = vadd.f32 %v674, %v763
      %v789 = vadd.f32 %v677, %v766
      %v790 = vadd.f32 %v680, %v769
      %v791 = vadd.f32 %v683, %v772
      %v792 = vadd.f32 %v686, %v775
      %v793 = vadd.f32 %v689, %v778
      %v794 = vadd.f32 %v692, %v781
      %v795 = vadd.f32 %v695, %v784
      %v796 = vld [vmem:[#allocation2 + $0xa] sm:$0xff]
      %v797 = vld [vmem:[#allocation2 + $0x12] sm:$0xff]
      %v798 = vld [vmem:[#allocation2 + $0x1a] sm:$0xff]
      %v799 = vld [vmem:[#allocation2 + $0x22] sm:$0xff]
      %v800 = vld [vmem:[#allocation2 + $0x2a] sm:$0xff]
      %v801 = vld [vmem:[#allocation2 + $0x32] sm:$0xff]
      %v802 = vld [vmem:[#allocation2 + $0x3a] sm:$0xff]
      %v803 = vld [vmem:[#allocation2 + $0x42] sm:$0xff]
      %v804 = vld [vmem:[#allocation2 + $0x4a] sm:$0xff]
      %v805 = vld [vmem:[#allocation2 + $0x52] sm:$0xff]
      %s806 = scalar_lea.vmem %s4, 24
      %v807 = vld [vmem:[%s806] sm:$0xff]
      %v809 = vsel %vm491, %v796, 0
      %v812 = vsel %vm491, %v797, 0
      %v815 = vsel %vm491, %v798, 0
      %v818 = vsel %vm491, %v799, 0
      %v821 = vsel %vm491, %v800, 0
      %v824 = vsel %vm491, %v801, 0
      %v827 = vsel %vm491, %v802, 0
      %v830 = vsel %vm491, %v803, 0
      %v833 = vsel %vm491, %v804, 0
      %v836 = vsel %vm491, %v805, 0
      %838 = vmatpush.msra.mxu0 0.0
      %839 = vmatpush.msra.mxu0 0.0
      %840 = vmatpush.msra.mxu0 0.0
      %841 = vmatpush.msra.mxu0 0.0
      %842 = vmatpush.msra.mxu0 0.0
      %843 = vmatpush.msra.mxu0 0.0
      %844 = vmatpush.msra.mxu0 0.0
      %845 = vmatpush.msra.mxu0 0.0
      %846 = vmatpush.msra.mxu0 0.0
      %847 = vmatpush.msra.mxu0 0.0
      %848 = vmatpush.msra.mxu0 0.0
      %849 = vmatpush.msra.mxu0 0.0
      %850 = vmatpush.msra.mxu0 0.0
      %851 = vmatpush.msra.mxu0 0.0
      %852 = vmatpush.msra.mxu0 0.0
      %853 = vmatpush.msra.mxu0 %v807
      %854 = vmatmul.f32.gmra.mxu0 %v809
      %v855 = vpop.f32.mrf.mxu0
      %v856 = vadd.f32 0.0, %v855
      %857 = vmatmul.f32.gmra.mxu0 %v812
      %v858 = vpop.f32.mrf.mxu0
      %v859 = vadd.f32 0.0, %v858
      %860 = vmatmul.f32.gmra.mxu0 %v815
      %v861 = vpop.f32.mrf.mxu0
      %v862 = vadd.f32 0.0, %v861
      %863 = vmatmul.f32.gmra.mxu0 %v818
      %v864 = vpop.f32.mrf.mxu0
      %v865 = vadd.f32 0.0, %v864
      %866 = vmatmul.f32.gmra.mxu0 %v821
      %v867 = vpop.f32.mrf.mxu0
      %v868 = vadd.f32 0.0, %v867
      %869 = vmatmul.f32.gmra.mxu0 %v824
      %v870 = vpop.f32.mrf.mxu0
      %v871 = vadd.f32 0.0, %v870
      %872 = vmatmul.f32.gmra.mxu0 %v827
      %v873 = vpop.f32.mrf.mxu0
      %v874 = vadd.f32 0.0, %v873
      %875 = vmatmul.f32.gmra.mxu0 %v830
      %v876 = vpop.f32.mrf.mxu0
      %v877 = vadd.f32 0.0, %v876
      %878 = vmatmul.f32.gmra.mxu0 %v833
      %v879 = vpop.f32.mrf.mxu0
      %v880 = vadd.f32 0.0, %v879
      %881 = vmatmul.f32.gmra.mxu0 %v836
      %v882 = vpop.f32.mrf.mxu0
      %v883 = vadd.f32 0.0, %v882
      %884 = vdwg.mxu0
      %v885 = vadd.f32 %v786, %v856
      %v886 = vadd.f32 %v787, %v859
      %v887 = vadd.f32 %v788, %v862
      %v888 = vadd.f32 %v789, %v865
      %v889 = vadd.f32 %v790, %v868
      %v890 = vadd.f32 %v791, %v871
      %v891 = vadd.f32 %v792, %v874
      %v892 = vadd.f32 %v793, %v877
      %v893 = vadd.f32 %v794, %v880
      %v894 = vadd.f32 %v795, %v883
      %v895 = vld [vmem:[#allocation2 + $0xb] sm:$0xff]
      %v896 = vld [vmem:[#allocation2 + $0x13] sm:$0xff]
      %v897 = vld [vmem:[#allocation2 + $0x1b] sm:$0xff]
      %v898 = vld [vmem:[#allocation2 + $0x23] sm:$0xff]
      %v899 = vld [vmem:[#allocation2 + $0x2b] sm:$0xff]
      %v900 = vld [vmem:[#allocation2 + $0x33] sm:$0xff]
      %v901 = vld [vmem:[#allocation2 + $0x3b] sm:$0xff]
      %v902 = vld [vmem:[#allocation2 + $0x43] sm:$0xff]
      %v903 = vld [vmem:[#allocation2 + $0x4b] sm:$0xff]
      %v904 = vld [vmem:[#allocation2 + $0x53] sm:$0xff]
      %s905 = scalar_lea.vmem %s4, 32
      %v906 = vld [vmem:[%s905] sm:$0xff]
      %v908 = vsel %vm491, %v895, 0
      %v911 = vsel %vm491, %v896, 0
      %v914 = vsel %vm491, %v897, 0
      %v917 = vsel %vm491, %v898, 0
      %v920 = vsel %vm491, %v899, 0
      %v923 = vsel %vm491, %v900, 0
      %v926 = vsel %vm491, %v901, 0
      %v929 = vsel %vm491, %v902, 0
      %v932 = vsel %vm491, %v903, 0
      %v935 = vsel %vm491, %v904, 0
      %937 = vmatpush.msra.mxu0 0.0
      %938 = vmatpush.msra.mxu0 0.0
      %939 = vmatpush.msra.mxu0 0.0
      %940 = vmatpush.msra.mxu0 0.0
      %941 = vmatpush.msra.mxu0 0.0
      %942 = vmatpush.msra.mxu0 0.0
      %943 = vmatpush.msra.mxu0 0.0
      %944 = vmatpush.msra.mxu0 0.0
      %945 = vmatpush.msra.mxu0 0.0
      %946 = vmatpush.msra.mxu0 0.0
      %947 = vmatpush.msra.mxu0 0.0
      %948 = vmatpush.msra.mxu0 0.0
      %949 = vmatpush.msra.mxu0 0.0
      %950 = vmatpush.msra.mxu0 0.0
      %951 = vmatpush.msra.mxu0 0.0
      %952 = vmatpush.msra.mxu0 %v906
      %953 = vmatmul.f32.gmra.mxu0 %v908
      %v954 = vpop.f32.mrf.mxu0
      %v955 = vadd.f32 0.0, %v954
      %956 = vmatmul.f32.gmra.mxu0 %v911
      %v957 = vpop.f32.mrf.mxu0
      %v958 = vadd.f32 0.0, %v957
      %959 = vmatmul.f32.gmra.mxu0 %v914
      %v960 = vpop.f32.mrf.mxu0
      %v961 = vadd.f32 0.0, %v960
      %962 = vmatmul.f32.gmra.mxu0 %v917
      %v963 = vpop.f32.mrf.mxu0
      %v964 = vadd.f32 0.0, %v963
      %965 = vmatmul.f32.gmra.mxu0 %v920
      %v966 = vpop.f32.mrf.mxu0
      %v967 = vadd.f32 0.0, %v966
      %968 = vmatmul.f32.gmra.mxu0 %v923
      %v969 = vpop.f32.mrf.mxu0
      %v970 = vadd.f32 0.0, %v969
      %971 = vmatmul.f32.gmra.mxu0 %v926
      %v972 = vpop.f32.mrf.mxu0
      %v973 = vadd.f32 0.0, %v972
      %974 = vmatmul.f32.gmra.mxu0 %v929
      %v975 = vpop.f32.mrf.mxu0
      %v976 = vadd.f32 0.0, %v975
      %977 = vmatmul.f32.gmra.mxu0 %v932
      %v978 = vpop.f32.mrf.mxu0
      %v979 = vadd.f32 0.0, %v978
      %980 = vmatmul.f32.gmra.mxu0 %v935
      %v981 = vpop.f32.mrf.mxu0
      %v982 = vadd.f32 0.0, %v981
      %983 = vdwg.mxu0
      %v984 = vadd.f32 %v885, %v955
      %v985 = vadd.f32 %v886, %v958
      %v986 = vadd.f32 %v887, %v961
      %v987 = vadd.f32 %v888, %v964
      %v988 = vadd.f32 %v889, %v967
      %v989 = vadd.f32 %v890, %v970
      %v990 = vadd.f32 %v891, %v973
      %v991 = vadd.f32 %v892, %v976
      %v992 = vadd.f32 %v893, %v979
      %v993 = vadd.f32 %v894, %v982
      %v994 = vld [vmem:[#allocation2 + $0xc] sm:$0xff]
      %v995 = vld [vmem:[#allocation2 + $0x14] sm:$0xff]
      %v996 = vld [vmem:[#allocation2 + $0x1c] sm:$0xff]
      %v997 = vld [vmem:[#allocation2 + $0x24] sm:$0xff]
      %v998 = vld [vmem:[#allocation2 + $0x2c] sm:$0xff]
      %v999 = vld [vmem:[#allocation2 + $0x34] sm:$0xff]
      %v1000 = vld [vmem:[#allocation2 + $0x3c] sm:$0xff]
      %v1001 = vld [vmem:[#allocation2 + $0x44] sm:$0xff]
      %v1002 = vld [vmem:[#allocation2 + $0x4c] sm:$0xff]
      %v1003 = vld [vmem:[#allocation2 + $0x54] sm:$0xff]
      %s1004 = scalar_lea.vmem %s4, 40
      %v1005 = vld [vmem:[%s1004] sm:$0xff]
      %v1007 = vsel %vm491, %v994, 0
      %v1010 = vsel %vm491, %v995, 0
      %v1013 = vsel %vm491, %v996, 0
      %v1016 = vsel %vm491, %v997, 0
      %v1019 = vsel %vm491, %v998, 0
      %v1022 = vsel %vm491, %v999, 0
      %v1025 = vsel %vm491, %v1000, 0
      %v1028 = vsel %vm491, %v1001, 0
      %v1031 = vsel %vm491, %v1002, 0
      %v1034 = vsel %vm491, %v1003, 0
      %1036 = vmatpush.msra.mxu0 0.0
      %1037 = vmatpush.msra.mxu0 0.0
      %1038 = vmatpush.msra.mxu0 0.0
      %1039 = vmatpush.msra.mxu0 0.0
      %1040 = vmatpush.msra.mxu0 0.0
      %1041 = vmatpush.msra.mxu0 0.0
      %1042 = vmatpush.msra.mxu0 0.0
      %1043 = vmatpush.msra.mxu0 0.0
      %1044 = vmatpush.msra.mxu0 0.0
      %1045 = vmatpush.msra.mxu0 0.0
      %1046 = vmatpush.msra.mxu0 0.0
      %1047 = vmatpush.msra.mxu0 0.0
      %1048 = vmatpush.msra.mxu0 0.0
      %1049 = vmatpush.msra.mxu0 0.0
      %1050 = vmatpush.msra.mxu0 0.0
      %1051 = vmatpush.msra.mxu0 %v1005
      %1052 = vmatmul.f32.gmra.mxu0 %v1007
      %v1053 = vpop.f32.mrf.mxu0
      %v1054 = vadd.f32 0.0, %v1053
      %1055 = vmatmul.f32.gmra.mxu0 %v1010
      %v1056 = vpop.f32.mrf.mxu0
      %v1057 = vadd.f32 0.0, %v1056
      %1058 = vmatmul.f32.gmra.mxu0 %v1013
      %v1059 = vpop.f32.mrf.mxu0
      %v1060 = vadd.f32 0.0, %v1059
      %1061 = vmatmul.f32.gmra.mxu0 %v1016
      %v1062 = vpop.f32.mrf.mxu0
      %v1063 = vadd.f32 0.0, %v1062
      %1064 = vmatmul.f32.gmra.mxu0 %v1019
      %v1065 = vpop.f32.mrf.mxu0
      %v1066 = vadd.f32 0.0, %v1065
      %1067 = vmatmul.f32.gmra.mxu0 %v1022
      %v1068 = vpop.f32.mrf.mxu0
      %v1069 = vadd.f32 0.0, %v1068
      %1070 = vmatmul.f32.gmra.mxu0 %v1025
      %v1071 = vpop.f32.mrf.mxu0
      %v1072 = vadd.f32 0.0, %v1071
      %1073 = vmatmul.f32.gmra.mxu0 %v1028
      %v1074 = vpop.f32.mrf.mxu0
      %v1075 = vadd.f32 0.0, %v1074
      %1076 = vmatmul.f32.gmra.mxu0 %v1031
      %v1077 = vpop.f32.mrf.mxu0
      %v1078 = vadd.f32 0.0, %v1077
      %1079 = vmatmul.f32.gmra.mxu0 %v1034
      %v1080 = vpop.f32.mrf.mxu0
      %v1081 = vadd.f32 0.0, %v1080
      %1082 = vdwg.mxu0
      %v1083 = vadd.f32 %v984, %v1054
      %v1084 = vadd.f32 %v985, %v1057
      %v1085 = vadd.f32 %v986, %v1060
      %v1086 = vadd.f32 %v987, %v1063
      %v1087 = vadd.f32 %v988, %v1066
      %v1088 = vadd.f32 %v989, %v1069
      %v1089 = vadd.f32 %v990, %v1072
      %v1090 = vadd.f32 %v991, %v1075
      %v1091 = vadd.f32 %v992, %v1078
      %v1092 = vadd.f32 %v993, %v1081
      %v1093 = vld [vmem:[#allocation2 + $0x14] sm:$0xff]
      %v1094 = vld [vmem:[#allocation2 + $0x1c] sm:$0xff]
      %v1095 = vld [vmem:[#allocation2 + $0x24] sm:$0xff]
      %v1096 = vld [vmem:[#allocation2 + $0x2c] sm:$0xff]
      %v1097 = vld [vmem:[#allocation2 + $0x34] sm:$0xff]
      %v1098 = vld [vmem:[#allocation2 + $0x3c] sm:$0xff]
      %v1099 = vld [vmem:[#allocation2 + $0x44] sm:$0xff]
      %v1100 = vld [vmem:[#allocation2 + $0x4c] sm:$0xff]
      %v1101 = vld [vmem:[#allocation2 + $0x54] sm:$0xff]
      %v1102 = vld [vmem:[#allocation2 + $0x5c] sm:$0xff]
      %s1103 = scalar_lea.vmem %s4, 48
      %v1104 = vld [vmem:[%s1103] sm:$0xff]
      %v1106 = vsel %vm491, %v1093, 0
      %v1109 = vsel %vm491, %v1094, 0
      %v1112 = vsel %vm491, %v1095, 0
      %v1115 = vsel %vm491, %v1096, 0
      %v1118 = vsel %vm491, %v1097, 0
      %v1121 = vsel %vm491, %v1098, 0
      %v1124 = vsel %vm491, %v1099, 0
      %v1127 = vsel %vm491, %v1100, 0
      %v1130 = vsel %vm491, %v1101, 0
      %v1133 = vsel %vm491, %v1102, 0
      %1135 = vmatpush.msra.mxu0 0.0
      %1136 = vmatpush.msra.mxu0 0.0
      %1137 = vmatpush.msra.mxu0 0.0
      %1138 = vmatpush.msra.mxu0 0.0
      %1139 = vmatpush.msra.mxu0 0.0
      %1140 = vmatpush.msra.mxu0 0.0
      %1141 = vmatpush.msra.mxu0 0.0
      %1142 = vmatpush.msra.mxu0 0.0
      %1143 = vmatpush.msra.mxu0 0.0
      %1144 = vmatpush.msra.mxu0 0.0
      %1145 = vmatpush.msra.mxu0 0.0
      %1146 = vmatpush.msra.mxu0 0.0
      %1147 = vmatpush.msra.mxu0 0.0
      %1148 = vmatpush.msra.mxu0 0.0
      %1149 = vmatpush.msra.mxu0 0.0
      %1150 = vmatpush.msra.mxu0 %v1104
      %1151 = vmatmul.f32.gmra.mxu0 %v1106
      %v1152 = vpop.f32.mrf.mxu0
      %v1153 = vadd.f32 0.0, %v1152
      %1154 = vmatmul.f32.gmra.mxu0 %v1109
      %v1155 = vpop.f32.mrf.mxu0
      %v1156 = vadd.f32 0.0, %v1155
      %1157 = vmatmul.f32.gmra.mxu0 %v1112
      %v1158 = vpop.f32.mrf.mxu0
      %v1159 = vadd.f32 0.0, %v1158
      %1160 = vmatmul.f32.gmra.mxu0 %v1115
      %v1161 = vpop.f32.mrf.mxu0
      %v1162 = vadd.f32 0.0, %v1161
      %1163 = vmatmul.f32.gmra.mxu0 %v1118
      %v1164 = vpop.f32.mrf.mxu0
      %v1165 = vadd.f32 0.0, %v1164
      %1166 = vmatmul.f32.gmra.mxu0 %v1121
      %v1167 = vpop.f32.mrf.mxu0
      %v1168 = vadd.f32 0.0, %v1167
      %1169 = vmatmul.f32.gmra.mxu0 %v1124
      %v1170 = vpop.f32.mrf.mxu0
      %v1171 = vadd.f32 0.0, %v1170
      %1172 = vmatmul.f32.gmra.mxu0 %v1127
      %v1173 = vpop.f32.mrf.mxu0
      %v1174 = vadd.f32 0.0, %v1173
      %1175 = vmatmul.f32.gmra.mxu0 %v1130
      %v1176 = vpop.f32.mrf.mxu0
      %v1177 = vadd.f32 0.0, %v1176
      %1178 = vmatmul.f32.gmra.mxu0 %v1133
      %v1179 = vpop.f32.mrf.mxu0
      %v1180 = vadd.f32 0.0, %v1179
      %1181 = vdwg.mxu0
      %v1182 = vadd.f32 %v1083, %v1153
      %v1183 = vadd.f32 %v1084, %v1156
      %v1184 = vadd.f32 %v1085, %v1159
      %v1185 = vadd.f32 %v1086, %v1162
      %v1186 = vadd.f32 %v1087, %v1165
      %v1187 = vadd.f32 %v1088, %v1168
      %v1188 = vadd.f32 %v1089, %v1171
      %v1189 = vadd.f32 %v1090, %v1174
      %v1190 = vadd.f32 %v1091, %v1177
      %v1191 = vadd.f32 %v1092, %v1180
      %v1192 = vld [vmem:[#allocation2 + $0x15] sm:$0xff]
      %v1193 = vld [vmem:[#allocation2 + $0x1d] sm:$0xff]
      %v1194 = vld [vmem:[#allocation2 + $0x25] sm:$0xff]
      %v1195 = vld [vmem:[#allocation2 + $0x2d] sm:$0xff]
      %v1196 = vld [vmem:[#allocation2 + $0x35] sm:$0xff]
      %v1197 = vld [vmem:[#allocation2 + $0x3d] sm:$0xff]
      %v1198 = vld [vmem:[#allocation2 + $0x45] sm:$0xff]
      %v1199 = vld [vmem:[#allocation2 + $0x4d] sm:$0xff]
      %v1200 = vld [vmem:[#allocation2 + $0x55] sm:$0xff]
      %v1201 = vld [vmem:[#allocation2 + $0x5d] sm:$0xff]
      %s1202 = scalar_lea.vmem %s4, 56
      %v1203 = vld [vmem:[%s1202] sm:$0xff]
      %v1205 = vsel %vm491, %v1192, 0
      %v1208 = vsel %vm491, %v1193, 0
      %v1211 = vsel %vm491, %v1194, 0
      %v1214 = vsel %vm491, %v1195, 0
      %v1217 = vsel %vm491, %v1196, 0
      %v1220 = vsel %vm491, %v1197, 0
      %v1223 = vsel %vm491, %v1198, 0
      %v1226 = vsel %vm491, %v1199, 0
      %v1229 = vsel %vm491, %v1200, 0
      %v1232 = vsel %vm491, %v1201, 0
      %1234 = vmatpush.msra.mxu0 0.0
      %1235 = vmatpush.msra.mxu0 0.0
      %1236 = vmatpush.msra.mxu0 0.0
      %1237 = vmatpush.msra.mxu0 0.0
      %1238 = vmatpush.msra.mxu0 0.0
      %1239 = vmatpush.msra.mxu0 0.0
      %1240 = vmatpush.msra.mxu0 0.0
      %1241 = vmatpush.msra.mxu0 0.0
      %1242 = vmatpush.msra.mxu0 0.0
      %1243 = vmatpush.msra.mxu0 0.0
      %1244 = vmatpush.msra.mxu0 0.0
      %1245 = vmatpush.msra.mxu0 0.0
      %1246 = vmatpush.msra.mxu0 0.0
      %1247 = vmatpush.msra.mxu0 0.0
      %1248 = vmatpush.msra.mxu0 0.0
      %1249 = vmatpush.msra.mxu0 %v1203
      %1250 = vmatmul.f32.gmra.mxu0 %v1205
      %v1251 = vpop.f32.mrf.mxu0
      %v1252 = vadd.f32 0.0, %v1251
      %1253 = vmatmul.f32.gmra.mxu0 %v1208
      %v1254 = vpop.f32.mrf.mxu0
      %v1255 = vadd.f32 0.0, %v1254
      %1256 = vmatmul.f32.gmra.mxu0 %v1211
      %v1257 = vpop.f32.mrf.mxu0
      %v1258 = vadd.f32 0.0, %v1257
      %1259 = vmatmul.f32.gmra.mxu0 %v1214
      %v1260 = vpop.f32.mrf.mxu0
      %v1261 = vadd.f32 0.0, %v1260
      %1262 = vmatmul.f32.gmra.mxu0 %v1217
      %v1263 = vpop.f32.mrf.mxu0
      %v1264 = vadd.f32 0.0, %v1263
      %1265 = vmatmul.f32.gmra.mxu0 %v1220
      %v1266 = vpop.f32.mrf.mxu0
      %v1267 = vadd.f32 0.0, %v1266
      %1268 = vmatmul.f32.gmra.mxu0 %v1223
      %v1269 = vpop.f32.mrf.mxu0
      %v1270 = vadd.f32 0.0, %v1269
      %1271 = vmatmul.f32.gmra.mxu0 %v1226
      %v1272 = vpop.f32.mrf.mxu0
      %v1273 = vadd.f32 0.0, %v1272
      %1274 = vmatmul.f32.gmra.mxu0 %v1229
      %v1275 = vpop.f32.mrf.mxu0
      %v1276 = vadd.f32 0.0, %v1275
      %1277 = vmatmul.f32.gmra.mxu0 %v1232
      %v1278 = vpop.f32.mrf.mxu0
      %v1279 = vadd.f32 0.0, %v1278
      %1280 = vdwg.mxu0
      %v1281 = vadd.f32 %v1182, %v1252
      %v1282 = vadd.f32 %v1183, %v1255
      %v1283 = vadd.f32 %v1184, %v1258
      %v1284 = vadd.f32 %v1185, %v1261
      %v1285 = vadd.f32 %v1186, %v1264
      %v1286 = vadd.f32 %v1187, %v1267
      %v1287 = vadd.f32 %v1188, %v1270
      %v1288 = vadd.f32 %v1189, %v1273
      %v1289 = vadd.f32 %v1190, %v1276
      %v1290 = vadd.f32 %v1191, %v1279
      %v1291 = vld [vmem:[#allocation2 + $0x16] sm:$0xff]
      %v1292 = vld [vmem:[#allocation2 + $0x1e] sm:$0xff]
      %v1293 = vld [vmem:[#allocation2 + $0x26] sm:$0xff]
      %v1294 = vld [vmem:[#allocation2 + $0x2e] sm:$0xff]
      %v1295 = vld [vmem:[#allocation2 + $0x36] sm:$0xff]
      %v1296 = vld [vmem:[#allocation2 + $0x3e] sm:$0xff]
      %v1297 = vld [vmem:[#allocation2 + $0x46] sm:$0xff]
      %v1298 = vld [vmem:[#allocation2 + $0x4e] sm:$0xff]
      %v1299 = vld [vmem:[#allocation2 + $0x56] sm:$0xff]
      %v1300 = vld [vmem:[#allocation2 + $0x5e] sm:$0xff]
      %s1301 = scalar_lea.vmem %s4, 64
      %v1302 = vld [vmem:[%s1301] sm:$0xff]
      %v1304 = vsel %vm491, %v1291, 0
      %v1307 = vsel %vm491, %v1292, 0
      %v1310 = vsel %vm491, %v1293, 0
      %v1313 = vsel %vm491, %v1294, 0
      %v1316 = vsel %vm491, %v1295, 0
      %v1319 = vsel %vm491, %v1296, 0
      %v1322 = vsel %vm491, %v1297, 0
      %v1325 = vsel %vm491, %v1298, 0
      %v1328 = vsel %vm491, %v1299, 0
      %v1331 = vsel %vm491, %v1300, 0
      %1333 = vmatpush.msra.mxu0 0.0
      %1334 = vmatpush.msra.mxu0 0.0
      %1335 = vmatpush.msra.mxu0 0.0
      %1336 = vmatpush.msra.mxu0 0.0
      %1337 = vmatpush.msra.mxu0 0.0
      %1338 = vmatpush.msra.mxu0 0.0
      %1339 = vmatpush.msra.mxu0 0.0
      %1340 = vmatpush.msra.mxu0 0.0
      %1341 = vmatpush.msra.mxu0 0.0
      %1342 = vmatpush.msra.mxu0 0.0
      %1343 = vmatpush.msra.mxu0 0.0
      %1344 = vmatpush.msra.mxu0 0.0
      %1345 = vmatpush.msra.mxu0 0.0
      %1346 = vmatpush.msra.mxu0 0.0
      %1347 = vmatpush.msra.mxu0 0.0
      %1348 = vmatpush.msra.mxu0 %v1302
      %1349 = vmatmul.f32.gmra.mxu0 %v1304
      %v1350 = vpop.f32.mrf.mxu0
      %v1351 = vadd.f32 0.0, %v1350
      %1352 = vmatmul.f32.gmra.mxu0 %v1307
      %v1353 = vpop.f32.mrf.mxu0
      %v1354 = vadd.f32 0.0, %v1353
      %1355 = vmatmul.f32.gmra.mxu0 %v1310
      %v1356 = vpop.f32.mrf.mxu0
      %v1357 = vadd.f32 0.0, %v1356
      %1358 = vmatmul.f32.gmra.mxu0 %v1313
      %v1359 = vpop.f32.mrf.mxu0
      %v1360 = vadd.f32 0.0, %v1359
      %1361 = vmatmul.f32.gmra.mxu0 %v1316
      %v1362 = vpop.f32.mrf.mxu0
      %v1363 = vadd.f32 0.0, %v1362
      %1364 = vmatmul.f32.gmra.mxu0 %v1319
      %v1365 = vpop.f32.mrf.mxu0
      %v1366 = vadd.f32 0.0, %v1365
      %1367 = vmatmul.f32.gmra.mxu0 %v1322
      %v1368 = vpop.f32.mrf.mxu0
      %v1369 = vadd.f32 0.0, %v1368
      %1370 = vmatmul.f32.gmra.mxu0 %v1325
      %v1371 = vpop.f32.mrf.mxu0
      %v1372 = vadd.f32 0.0, %v1371
      %1373 = vmatmul.f32.gmra.mxu0 %v1328
      %v1374 = vpop.f32.mrf.mxu0
      %v1375 = vadd.f32 0.0, %v1374
      %1376 = vmatmul.f32.gmra.mxu0 %v1331
      %v1377 = vpop.f32.mrf.mxu0
      %v1378 = vadd.f32 0.0, %v1377
      %1379 = vdwg.mxu0
      %v1380 = vadd.f32 %v1281, %v1351
      %v1381 = vadd.f32 %v1282, %v1354
      %v1382 = vadd.f32 %v1283, %v1357
      %v1383 = vadd.f32 %v1284, %v1360
      %v1384 = vadd.f32 %v1285, %v1363
      %v1385 = vadd.f32 %v1286, %v1366
      %v1386 = vadd.f32 %v1287, %v1369
      %v1387 = vadd.f32 %v1288, %v1372
      %v1388 = vadd.f32 %v1289, %v1375
      %v1389 = vadd.f32 %v1290, %v1378
      %v1390 = vld [vmem:[%s5] sm:$0x1]
      %v1392 = vperm.slane %v1390, 0
      %v1394 = vadd.f32 %v1380, %v1392
      %v1395 = vadd.f32 %v1381, %v1392
      %v1396 = vadd.f32 %v1382, %v1392
      %v1397 = vadd.f32 %v1383, %v1392
      %v1398 = vadd.f32 %v1384, %v1392
      %v1399 = vadd.f32 %v1385, %v1392
      %v1400 = vadd.f32 %v1386, %v1392
      %v1401 = vadd.f32 %v1387, %v1392
      %v1402 = vadd.f32 %v1388, %v1392
      %v1403 = vadd.f32 %v1389, %v1392
      %v1404 = vmax.f32 %v1394, 0.0
      %v1405 = vmax.f32 %v1395, 0.0
      %v1406 = vmax.f32 %v1396, 0.0
      %v1407 = vmax.f32 %v1397, 0.0
      %v1408 = vmax.f32 %v1398, 0.0
      %v1409 = vmax.f32 %v1399, 0.0
      %v1410 = vmax.f32 %v1400, 0.0
      %v1411 = vmax.f32 %v1401, 0.0
      %v1412 = vmax.f32 %v1402, 0.0
      %v1413 = vmax.f32 %v1403, 0.0
      %v1414 = vmin.f32 %v1404, 6.0
      %v1415 = vmin.f32 %v1405, 6.0
      %v1416 = vmin.f32 %v1406, 6.0
      %v1417 = vmin.f32 %v1407, 6.0
      %v1418 = vmin.f32 %v1408, 6.0
      %v1419 = vmin.f32 %v1409, 6.0
      %v1420 = vmin.f32 %v1410, 6.0
      %v1421 = vmin.f32 %v1411, 6.0
      %v1422 = vmin.f32 %v1412, 6.0
      %v1423 = vmin.f32 %v1413, 6.0
      %1424 = vst.msk [vmem:[%s251] sm:$0xff] %vm491, %v1414
      %1425 = vst.msk [vmem:[%s251 + $0x8] sm:$0xff] %vm491, %v1415
      %1426 = vst.msk [vmem:[%s251 + $0x10] sm:$0xff] %vm491, %v1416
      %1427 = vst.msk [vmem:[%s251 + $0x18] sm:$0xff] %vm491, %v1417
      %1428 = vst.msk [vmem:[%s251 + $0x20] sm:$0xff] %vm491, %v1418
      %1429 = vst.msk [vmem:[%s251 + $0x28] sm:$0xff] %vm491, %v1419
      %1430 = vst.msk [vmem:[%s251 + $0x30] sm:$0xff] %vm491, %v1420
      %1431 = vst.msk [vmem:[%s251 + $0x38] sm:$0xff] %vm491, %v1421
      %1432 = vst.msk [vmem:[%s251 + $0x40] sm:$0xff] %vm491, %v1422
      %1433 = vst.msk [vmem:[%s251 + $0x48] sm:$0xff] %vm491, %v1423
      %p1434 = scmp.lt.s32.totalorder %s17, 1
      %s1435 = scalar_select %p1434, %s17, 1
      %s1436 = smul.addr %s1435, 10
      %s1437 = smul.addr %s1436, 8
      %s1438 = scalar_lea.vmem %s6, %s1437
      // Predicated region
      $region45: #{resblock_forward.1} parent=43 // pred_check
        %p1439 = pneg %p166
      $region46: #{resblock_forward.1} parent=43 // pred_check_branch
        %1441 = sbr.rel (%p1439) target = $region48
      $region47: #{resblock_forward.1} parent=43 // pred_region
        _
      $region48: #{resblock_forward.1} parent=43 // pred_fallthru
        _
    $region44: #{resblock_forward.1} parent=5 // pred_fallthru
      _
    %p1442 = scmp.le.s32.totalorder 2, %s12
    // Predicated region
    $region49: #{resblock_forward.1} parent=5 // pred_check
      %p1443 = pneg %p1442
    $region50: #{resblock_forward.1} parent=5 // pred_check_branch
      %1445 = sbr.rel (%p1443) target = $region52
    $region51: #{resblock_forward.1} parent=5 // pred_region
      %s1446 = ssub.s32 %s12, 2
      // Predicated region
      $region53: #{resblock_forward.1} parent=51 // pred_check
        %p1447 = pneg %p172
      $region54: #{resblock_forward.1} parent=51 // pred_check_branch
        %1449 = sbr.rel (%p1447) target = $region56
      $region55: #{resblock_forward.1} parent=51 // pred_region
        %p1450 = scmp.lt.s32.totalorder %s18, 1
        %s1451 = scalar_select %p1450, %s18, 1
        %s1452 = smul.addr %s1451, 10
        %s1453 = smul.addr %s1452, 8
        %s1454 = scalar_lea.vmem %s6, %s1453
      $region56: #{resblock_forward.1} parent=51 // pred_fallthru
        _
    $region52: #{resblock_forward.1} parent=5 // pred_fallthru
      _
  $region6: #{resblock_forward.1} parent=0 // loop_footer
    %s16 = sadd.s32 1, %s12
  $region7: #{resblock_forward.1} parent=0 // loop_footer_branch
    %11 = sbr.rel target = $region3
  $region8: #{resblock_forward.1} parent=0 // loop_exit
    _

</llo_original>
